<compile_context>
chip_gen: v7x
topology: tpu7x:2x2x1
jax: 0.10.0
libtpu: 0.0.40
codegen_flags: <defaults>
</compile_context>

<pallas_src>
import functools

import jax
import jax.numpy as jnp
from jax import lax
from jax.experimental import pallas as pl
from jax.experimental.pallas import tpu as pltpu


# ---------------------------------------------------------------------------
# Pallas kernel: row-tiled GEMM + bias, optional fused output ReLU and
# fused residual (skip) add.
# ---------------------------------------------------------------------------
def _gemm_bias_kernel(a_ref, w_ref, b_ref, *rest, relu_out, has_skip):
    if has_skip:
        s_ref, o_ref = rest
    else:
        (o_ref,) = rest
    acc = jnp.dot(a_ref[...], w_ref[...], preferred_element_type=jnp.float32)
    acc = acc + b_ref[...]                      # (1, O) broadcast over rows
    if relu_out:                                # ReLU fused into producing conv
        acc = jnp.maximum(acc, 0.0)
    if has_skip:                                # fused residual add
        acc = acc + s_ref[...].astype(jnp.float32)
    o_ref[...] = acc.astype(o_ref.dtype)


def _round_up(x, m):
    return (x + m - 1) // m * m


def _choose_tm(m):
    """Fixed row tiles for pipelining/megacore; small layers take one tile."""
    if m >= 1024:
        return 512
    if m >= 256:
        return 128
    return max(8, _round_up(m, 8))


def _im2col_nhwc(x_pad, kh, kw, stride):
    """x_pad: (N, Hp, Wp, C) -> (N*OH*OW, kh*kw*C); K ordered (kh, kw, c)."""
    N, Hp, Wp, C = x_pad.shape
    OH = (Hp - kh) // stride + 1
    OW = (Wp - kw) // stride + 1
    patches = []
    for i in range(kh):
        for j in range(kw):
            patches.append(
                x_pad[:, i:i + stride * OH:stride, j:j + stride * OW:stride, :])
    cols = jnp.concatenate(patches, axis=-1)    # (N, OH, OW, kh*kw*C)
    return cols.reshape(N * OH * OW, kh * kw * C), OH, OW


def conv2d_nhwc(x, weight, bias, *, stride=1, pad=0, relu_in=False,
                relu_out=False, skip=None, compute_dtype=jnp.bfloat16):
    """Conv2d on NHWC activations (OIHW weights) as an im2col GEMM.

    Returns NHWC output.  `relu_in` applies ReLU to the conv input (once, on
    the compact activation), `relu_out` fuses ReLU on the conv output,
    `skip` (NHWC, same shape as output) fuses a residual add.
    """
    N, H, W, C = x.shape
    O, Cw, kh, kw = weight.shape
    assert Cw == C

    if relu_in:
        x = jnp.maximum(x, 0.0)
    if pad > 0:
        x = jnp.pad(x, ((0, 0), (pad, pad), (pad, pad), (0, 0)), mode="reflect")

    if kh == 1 and kw == 1 and stride == 1:
        OH, OW = x.shape[1], x.shape[2]
        cols = x.reshape(N * OH * OW, C)        # 1x1 conv: already (M, C)
    else:
        cols, OH, OW = _im2col_nhwc(x, kh, kw, stride)

    M, K = cols.shape
    # (O, C, kh, kw) -> (kh, kw, C, O): K-order matches the im2col concat order.
    w_mat = weight.transpose(2, 3, 1, 0).reshape(K, O).astype(compute_dtype)
    b_mat = bias.reshape(1, O).astype(jnp.float32)
    cols = cols.astype(compute_dtype)

    tm = _choose_tm(M)
    M_pad = _round_up(M, tm)
    if M_pad != M:
        cols = jnp.pad(cols, ((0, M_pad - M), (0, 0)))
    grid = (M_pad // tm,)

    in_specs = [
        pl.BlockSpec((tm, K), lambda i: (i, 0)),
        pl.BlockSpec((K, O), lambda i: (0, 0)),
        pl.BlockSpec((1, O), lambda i: (0, 0)),
    ]
    args = [cols, w_mat, b_mat]
    if skip is not None:
        skip_mat = skip.reshape(M, O)
        if M_pad != M:
            skip_mat = jnp.pad(skip_mat, ((0, M_pad - M), (0, 0)))
        in_specs.append(pl.BlockSpec((tm, O), lambda i: (i, 0)))
        args.append(skip_mat)

    out = pl.pallas_call(
        functools.partial(_gemm_bias_kernel, relu_out=relu_out,
                          has_skip=skip is not None),
        out_shape=jax.ShapeDtypeStruct((M_pad, O), jnp.float32),
        grid=grid,
        in_specs=in_specs,
        out_specs=pl.BlockSpec((tm, O), lambda i: (i, 0)),
        compiler_params=pltpu.CompilerParams(
            dimension_semantics=("parallel",)),
    )(*args)

    if M_pad != M:
        out = out[:M]
    return out.reshape(N, OH, OW, O)            # NHWC, no transpose needed


# ---------------------------------------------------------------------------
# Encoder module (parameters built deterministically in-script).
# ---------------------------------------------------------------------------
def init_encoder_params(key, channel_size, hidden_dim):
    keys = jax.random.split(key, 12)

    def conv_p(kw_, kb_, o, c, k):
        w = jax.random.normal(kw_, (o, c, k, k), jnp.float32) * 0.05
        b = jax.random.normal(kb_, (o,), jnp.float32) * 0.05
        return w, b

    p = {}
    p["c1_w"], p["c1_b"] = conv_p(keys[0], keys[1], hidden_dim, channel_size, 4)
    p["c2_w"], p["c2_b"] = conv_p(keys[2], keys[3], hidden_dim, hidden_dim, 4)
    p["r1a_w"], p["r1a_b"] = conv_p(keys[4], keys[5], hidden_dim, hidden_dim, 3)
    p["r1b_w"], p["r1b_b"] = conv_p(keys[6], keys[7], hidden_dim, hidden_dim, 1)
    p["r2a_w"], p["r2a_b"] = conv_p(keys[8], keys[9], hidden_dim, hidden_dim, 3)
    p["r2b_w"], p["r2b_b"] = conv_p(keys[10], keys[11], hidden_dim, hidden_dim, 1)
    return p


def encoder_forward(params, x, compute_dtype=jnp.bfloat16):
    """x: (B, T, C, H, W) -> (B, T, hidden, H//4, W//4)."""
    B, T, C, H, W = x.shape
    # One layout conversion at the module boundary; NHWC internally.
    x = x.reshape(B * T, C, H, W).transpose(0, 2, 3, 1)

    # conv_block: Conv(4,2,1,reflect) -> ReLU (fused) -> Conv(4,2,1,reflect)
    h = conv2d_nhwc(x, params["c1_w"], params["c1_b"], stride=2, pad=1,
                    relu_out=True, compute_dtype=compute_dtype)
    h = conv2d_nhwc(h, params["c2_w"], params["c2_b"], stride=2, pad=1,
                    compute_dtype=compute_dtype)

    # residual block 1: ReLU -> Conv3x3(reflect) -> ReLU -> Conv1x1, + skip
    t = conv2d_nhwc(h, params["r1a_w"], params["r1a_b"], stride=1, pad=1,
                    relu_in=True, relu_out=True, compute_dtype=compute_dtype)
    r1 = conv2d_nhwc(t, params["r1b_w"], params["r1b_b"], stride=1, pad=0,
                     skip=h, compute_dtype=compute_dtype)

    # residual block 2
    t = conv2d_nhwc(r1, params["r2a_w"], params["r2a_b"], stride=1, pad=1,
                    relu_in=True, relu_out=True, compute_dtype=compute_dtype)
    out = conv2d_nhwc(t, params["r2b_w"], params["r2b_b"], stride=1, pad=0,
                      skip=r1, compute_dtype=compute_dtype)

    out = out.transpose(0, 3, 1, 2)             # back to NCHW at the boundary
    _, hid, h1, w1 = out.shape
    return out.reshape(B, T, hid, h1, w1)


# ---------------------------------------------------------------------------
# Pure-JAX reference (lax conv, NCHW) for correctness checks.
# ---------------------------------------------------------------------------
def _conv_ref(x, w, b, stride, pad):
    if pad > 0:
        x = jnp.pad(x, ((0, 0), (0, 0), (pad, pad), (pad, pad)), mode="reflect")
    y = lax.conv_general_dilated(x, w, (stride, stride), "VALID",
                                 dimension_numbers=("NCHW", "OIHW", "NCHW"))
    return y + b.reshape(1, -1, 1, 1)


def encoder_forward_ref(p, x):
    B, T, C, H, W = x.shape
    x = x.reshape(B * T, C, H, W)
    h = jax.nn.relu(_conv_ref(x, p["c1_w"], p["c1_b"], 2, 1))
    h = _conv_ref(h, p["c2_w"], p["c2_b"], 2, 1)
    r = _conv_ref(jax.nn.relu(h), p["r1a_w"], p["r1a_b"], 1, 1)
    r = _conv_ref(jax.nn.relu(r), p["r1b_w"], p["r1b_b"], 1, 0)
    r1 = r + h
    r = _conv_ref(jax.nn.relu(r1), p["r2a_w"], p["r2a_b"], 1, 1)
    r = _conv_ref(jax.nn.relu(r), p["r2b_w"], p["r2b_b"], 1, 0)
    out = r + r1
    _, hid, h1, w1 = out.shape
    return out.reshape(B, T, hid, h1, w1)


if __name__ == "__main__":
    B, T, C, H, W = 2, 2, 4, 16, 16
    hidden_dim = 32

    key = jax.random.PRNGKey(0)
    k_x, k_p = jax.random.split(key)
    x = jax.random.normal(k_x, (B, T, C, H, W), jnp.float32)
    params = init_encoder_params(k_p, C, hidden_dim)

    ref = jax.block_until_ready(encoder_forward_ref(params, x))

    # Exact-semantics check (f32 MXU inputs).
    out_f32 = jax.block_until_ready(
        jax.jit(functools.partial(encoder_forward, compute_dtype=jnp.float32))(
            params, x))
    assert out_f32.shape == (B, T, hidden_dim, H // 4, W // 4), out_f32.shape
    assert jnp.allclose(out_f32, ref, atol=1e-4, rtol=1e-4), \
        float(jnp.max(jnp.abs(out_f32 - ref)))

    # Default (bf16 MXU inputs, f32 accumulate) — relaxed tolerance.
    out_bf16 = jax.block_until_ready(jax.jit(encoder_forward)(params, x))
    assert out_bf16.shape == (B, T, hidden_dim, H // 4, W // 4), out_bf16.shape
    assert jnp.allclose(out_bf16, ref, atol=5e-2, rtol=5e-2), \
        float(jnp.max(jnp.abs(out_bf16 - ref)))

    print("KERNEL_OK")
</pallas_src>

<mosaic_0001>
module attributes {stable_mosaic.version = 11 : i64} {
  func.func @_gemm_bias_kernel(%arg0: i32, %arg1: memref<128x64xf32, #tpu.memory_space<vmem>>, %arg2: memref<64x32xf32, #tpu.memory_space<vmem>>, %arg3: memref<1x32xf32, #tpu.memory_space<vmem>>, %arg4: memref<128x32xf32, #tpu.memory_space<vmem>>) attributes {dimension_semantics = [#tpu.dimension_semantics<parallel>], iteration_bounds = array<i64: 2>, scalar_prefetch = 0 : i64, scratch_operands = 0 : i64, tpu.core_type = #tpu.core_type<tc>, window_params = [{transform_indices = @transform_0, window_bounds = array<i64: 128, 64>}, {pipeline_mode = #tpu.pipeline_mode<synchronous>, transform_indices = @transform_1, window_bounds = array<i64: 64, 32>}, {pipeline_mode = #tpu.pipeline_mode<synchronous>, transform_indices = @transform_2, window_bounds = array<i64: 1, 32>}, {transform_indices = @transform_3, window_bounds = array<i64: 128, 32>}]} {
    %c0 = arith.constant 0 : index
    %c0_0 = arith.constant 0 : index
    %0 = vector.load %arg1[%c0, %c0_0] : memref<128x64xf32, #tpu.memory_space<vmem>>, vector<128x64xf32>
    %c0_1 = arith.constant 0 : index
    %c0_2 = arith.constant 0 : index
    %1 = vector.load %arg2[%c0_1, %c0_2] : memref<64x32xf32, #tpu.memory_space<vmem>>, vector<64x32xf32>
    %cst = arith.constant dense<0.000000e+00> : vector<128x32xf32>
    %2 = tpu.matmul %0, %1, %cst {dimension_numbers = #tpu.dot_dimension_numbers<[1], [0], [0], [1], [0, 0, 1, 1], [], []>} : vector<128x64xf32>, vector<64x32xf32>, vector<128x32xf32> -> vector<128x32xf32>
    %c0_3 = arith.constant 0 : index
    %c0_4 = arith.constant 0 : index
    %3 = vector.load %arg3[%c0_3, %c0_4] : memref<1x32xf32, #tpu.memory_space<vmem>>, vector<1x32xf32>
    %4 = vector.broadcast %3 : vector<1x32xf32> to vector<128x32xf32>
    %5 = arith.addf %2, %4 : vector<128x32xf32>
    %cst_5 = arith.constant 0.000000e+00 : f32
    %6 = vector.broadcast %cst_5 : f32 to vector<128x32xf32>
    %7 = arith.maximumf %5, %6 : vector<128x32xf32>
    %c0_6 = arith.constant 0 : index
    %c0_7 = arith.constant 0 : index
    %8 = vector.load %arg4[%c0_6, %c0_7] : memref<128x32xf32, #tpu.memory_space<vmem>>, vector<128x32xf32>
    tpu.vector_store %arg4[%c0_6, %c0_7], %7 {strides = array<i32>} : memref<128x32xf32, #tpu.memory_space<vmem>>, vector<128x32xf32>,
    return
  }
  func.func @transform_0(%arg0: i32) -> (i32, i32) {
    %c0_i32 = arith.constant 0 : i32
    %c0_i32_0 = arith.constant 0 : i32
    return %arg0, %c0_i32 : i32, i32
  }
  func.func @transform_1(%arg0: i32) -> (i32, i32) {
    %c0_i32 = arith.constant 0 : i32
    %c0_i32_0 = arith.constant 0 : i32
    %c0_i32_1 = arith.constant 0 : i32
    return %c0_i32, %c0_i32_0 : i32, i32
  }
  func.func @transform_2(%arg0: i32) -> (i32, i32) {
    %c0_i32 = arith.constant 0 : i32
    %c0_i32_0 = arith.constant 0 : i32
    %c0_i32_1 = arith.constant 0 : i32
    return %c0_i32, %c0_i32_0 : i32, i32
  }
  func.func @transform_3(%arg0: i32) -> (i32, i32) {
    %c0_i32 = arith.constant 0 : i32
    %c0_i32_0 = arith.constant 0 : i32
    return %arg0, %c0_i32 : i32, i32
  }
}

module attributes {stable_mosaic.version = 11 : i64} {
  func.func @_gemm_bias_kernel(%arg0: i32, %arg1: memref<64x512xf32, #tpu.memory_space<vmem>>, %arg2: memref<512x32xf32, #tpu.memory_space<vmem>>, %arg3: memref<1x32xf32, #tpu.memory_space<vmem>>, %arg4: memref<64x32xf32, #tpu.memory_space<vmem>>) attributes {dimension_semantics = [#tpu.dimension_semantics<parallel>], iteration_bounds = array<i64: 1>, scalar_prefetch = 0 : i64, scratch_operands = 0 : i64, tpu.core_type = #tpu.core_type<tc>, window_params = [{transform_indices = @transform_0, window_bounds = array<i64: 64, 512>}, {pipeline_mode = #tpu.pipeline_mode<synchronous>, transform_indices = @transform_1, window_bounds = array<i64: 512, 32>}, {pipeline_mode = #tpu.pipeline_mode<synchronous>, transform_indices = @transform_2, window_bounds = array<i64: 1, 32>}, {transform_indices = @transform_3, window_bounds = array<i64: 64, 32>}]} {
    %c0 = arith.constant 0 : index
    %c0_0 = arith.constant 0 : index
    %0 = vector.load %arg1[%c0, %c0_0] : memref<64x512xf32, #tpu.memory_space<vmem>>, vector<64x512xf32>
    %c0_1 = arith.constant 0 : index
    %c0_2 = arith.constant 0 : index
    %1 = vector.load %arg2[%c0_1, %c0_2] : memref<512x32xf32, #tpu.memory_space<vmem>>, vector<512x32xf32>
    %cst = arith.constant dense<0.000000e+00> : vector<64x32xf32>
    %2 = tpu.matmul %0, %1, %cst {dimension_numbers = #tpu.dot_dimension_numbers<[1], [0], [0], [1], [0, 0, 1, 1], [], []>} : vector<64x512xf32>, vector<512x32xf32>, vector<64x32xf32> -> vector<64x32xf32>
    %c0_3 = arith.constant 0 : index
    %c0_4 = arith.constant 0 : index
    %3 = vector.load %arg3[%c0_3, %c0_4] : memref<1x32xf32, #tpu.memory_space<vmem>>, vector<1x32xf32>
    %4 = vector.broadcast %3 : vector<1x32xf32> to vector<64x32xf32>
    %5 = arith.addf %2, %4 : vector<64x32xf32>
    %c0_5 = arith.constant 0 : index
    %c0_6 = arith.constant 0 : index
    %6 = vector.load %arg4[%c0_5, %c0_6] : memref<64x32xf32, #tpu.memory_space<vmem>>, vector<64x32xf32>
    tpu.vector_store %arg4[%c0_5, %c0_6], %5 {strides = array<i32>} : memref<64x32xf32, #tpu.memory_space<vmem>>, vector<64x32xf32>,
    return
  }
  func.func @transform_0(%arg0: i32) -> (i32, i32) {
    %c0_i32 = arith.constant 0 : i32
    %c0_i32_0 = arith.constant 0 : i32
    return %arg0, %c0_i32 : i32, i32
  }
  func.func @transform_1(%arg0: i32) -> (i32, i32) {
    %c0_i32 = arith.constant 0 : i32
    %c0_i32_0 = arith.constant 0 : i32
    %c0_i32_1 = arith.constant 0 : i32
    return %c0_i32, %c0_i32_0 : i32, i32
  }
  func.func @transform_2(%arg0: i32) -> (i32, i32) {
    %c0_i32 = arith.constant 0 : i32
    %c0_i32_0 = arith.constant 0 : i32
    %c0_i32_1 = arith.constant 0 : i32
    return %c0_i32, %c0_i32_0 : i32, i32
  }
  func.func @transform_3(%arg0: i32) -> (i32, i32) {
    %c0_i32 = arith.constant 0 : i32
    %c0_i32_0 = arith.constant 0 : i32
    return %arg0, %c0_i32 : i32, i32
  }
}

module attributes {stable_mosaic.version = 11 : i64} {
  func.func @_gemm_bias_kernel(%arg0: i32, %arg1: memref<64x288xf32, #tpu.memory_space<vmem>>, %arg2: memref<288x32xf32, #tpu.memory_space<vmem>>, %arg3: memref<1x32xf32, #tpu.memory_space<vmem>>, %arg4: memref<64x32xf32, #tpu.memory_space<vmem>>) attributes {dimension_semantics = [#tpu.dimension_semantics<parallel>], iteration_bounds = array<i64: 1>, scalar_prefetch = 0 : i64, scratch_operands = 0 : i64, tpu.core_type = #tpu.core_type<tc>, window_params = [{transform_indices = @transform_0, window_bounds = array<i64: 64, 288>}, {pipeline_mode = #tpu.pipeline_mode<synchronous>, transform_indices = @transform_1, window_bounds = array<i64: 288, 32>}, {pipeline_mode = #tpu.pipeline_mode<synchronous>, transform_indices = @transform_2, window_bounds = array<i64: 1, 32>}, {transform_indices = @transform_3, window_bounds = array<i64: 64, 32>}]} {
    %c0 = arith.constant 0 : index
    %c0_0 = arith.constant 0 : index
    %0 = vector.load %arg1[%c0, %c0_0] : memref<64x288xf32, #tpu.memory_space<vmem>>, vector<64x288xf32>
    %c0_1 = arith.constant 0 : index
    %c0_2 = arith.constant 0 : index
    %1 = vector.load %arg2[%c0_1, %c0_2] : memref<288x32xf32, #tpu.memory_space<vmem>>, vector<288x32xf32>
    %cst = arith.constant dense<0.000000e+00> : vector<64x32xf32>
    %2 = tpu.matmul %0, %1, %cst {dimension_numbers = #tpu.dot_dimension_numbers<[1], [0], [0], [1], [0, 0, 1, 1], [], []>} : vector<64x288xf32>, vector<288x32xf32>, vector<64x32xf32> -> vector<64x32xf32>
    %c0_3 = arith.constant 0 : index
    %c0_4 = arith.constant 0 : index
    %3 = vector.load %arg3[%c0_3, %c0_4] : memref<1x32xf32, #tpu.memory_space<vmem>>, vector<1x32xf32>
    %4 = vector.broadcast %3 : vector<1x32xf32> to vector<64x32xf32>
    %5 = arith.addf %2, %4 : vector<64x32xf32>
    %cst_5 = arith.constant 0.000000e+00 : f32
    %6 = vector.broadcast %cst_5 : f32 to vector<64x32xf32>
    %7 = arith.maximumf %5, %6 : vector<64x32xf32>
    %c0_6 = arith.constant 0 : index
    %c0_7 = arith.constant 0 : index
    %8 = vector.load %arg4[%c0_6, %c0_7] : memref<64x32xf32, #tpu.memory_space<vmem>>, vector<64x32xf32>
    tpu.vector_store %arg4[%c0_6, %c0_7], %7 {strides = array<i32>} : memref<64x32xf32, #tpu.memory_space<vmem>>, vector<64x32xf32>,
    return
  }
  func.func @transform_0(%arg0: i32) -> (i32, i32) {
    %c0_i32 = arith.constant 0 : i32
    %c0_i32_0 = arith.constant 0 : i32
    return %arg0, %c0_i32 : i32, i32
  }
  func.func @transform_1(%arg0: i32) -> (i32, i32) {
    %c0_i32 = arith.constant 0 : i32
    %c0_i32_0 = arith.constant 0 : i32
    %c0_i32_1 = arith.constant 0 : i32
    return %c0_i32, %c0_i32_0 : i32, i32
  }
  func.func @transform_2(%arg0: i32) -> (i32, i32) {
    %c0_i32 = arith.constant 0 : i32
    %c0_i32_0 = arith.constant 0 : i32
    %c0_i32_1 = arith.constant 0 : i32
    return %c0_i32, %c0_i32_0 : i32, i32
  }
  func.func @transform_3(%arg0: i32) -> (i32, i32) {
    %c0_i32 = arith.constant 0 : i32
    %c0_i32_0 = arith.constant 0 : i32
    return %arg0, %c0_i32 : i32, i32
  }
}

module attributes {stable_mosaic.version = 11 : i64} {
  func.func @_gemm_bias_kernel(%arg0: i32, %arg1: memref<64x32xf32, #tpu.memory_space<vmem>>, %arg2: memref<32x32xf32, #tpu.memory_space<vmem>>, %arg3: memref<1x32xf32, #tpu.memory_space<vmem>>, %arg4: memref<64x32xf32, #tpu.memory_space<vmem>>, %arg5: memref<64x32xf32, #tpu.memory_space<vmem>>) attributes {dimension_semantics = [#tpu.dimension_semantics<parallel>], iteration_bounds = array<i64: 1>, scalar_prefetch = 0 : i64, scratch_operands = 0 : i64, tpu.core_type = #tpu.core_type<tc>, window_params = [{transform_indices = @transform_0, window_bounds = array<i64: 64, 32>}, {pipeline_mode = #tpu.pipeline_mode<synchronous>, transform_indices = @transform_1, window_bounds = array<i64: 32, 32>}, {pipeline_mode = #tpu.pipeline_mode<synchronous>, transform_indices = @transform_2, window_bounds = array<i64: 1, 32>}, {transform_indices = @transform_3, window_bounds = array<i64: 64, 32>}, {transform_indices = @transform_4, window_bounds = array<i64: 64, 32>}]} {
    %c0 = arith.constant 0 : index
    %c0_0 = arith.constant 0 : index
    %0 = vector.load %arg1[%c0, %c0_0] : memref<64x32xf32, #tpu.memory_space<vmem>>, vector<64x32xf32>
    %c0_1 = arith.constant 0 : index
    %c0_2 = arith.constant 0 : index
    %1 = vector.load %arg2[%c0_1, %c0_2] : memref<32x32xf32, #tpu.memory_space<vmem>>, vector<32x32xf32>
    %cst = arith.constant dense<0.000000e+00> : vector<64x32xf32>
    %2 = tpu.matmul %0, %1, %cst {dimension_numbers = #tpu.dot_dimension_numbers<[1], [0], [0], [1], [0, 0, 1, 1], [], []>} : vector<64x32xf32>, vector<32x32xf32>, vector<64x32xf32> -> vector<64x32xf32>
    %c0_3 = arith.constant 0 : index
    %c0_4 = arith.constant 0 : index
    %3 = vector.load %arg3[%c0_3, %c0_4] : memref<1x32xf32, #tpu.memory_space<vmem>>, vector<1x32xf32>
    %4 = vector.broadcast %3 : vector<1x32xf32> to vector<64x32xf32>
    %5 = arith.addf %2, %4 : vector<64x32xf32>
    %c0_5 = arith.constant 0 : index
    %c0_6 = arith.constant 0 : index
    %6 = vector.load %arg4[%c0_5, %c0_6] : memref<64x32xf32, #tpu.memory_space<vmem>>, vector<64x32xf32>
    %7 = arith.addf %5, %6 : vector<64x32xf32>
    %c0_7 = arith.constant 0 : index
    %c0_8 = arith.constant 0 : index
    %8 = vector.load %arg5[%c0_7, %c0_8] : memref<64x32xf32, #tpu.memory_space<vmem>>, vector<64x32xf32>
    tpu.vector_store %arg5[%c0_7, %c0_8], %7 {strides = array<i32>} : memref<64x32xf32, #tpu.memory_space<vmem>>, vector<64x32xf32>,
    return
  }
  func.func @transform_0(%arg0: i32) -> (i32, i32) {
    %c0_i32 = arith.constant 0 : i32
    %c0_i32_0 = arith.constant 0 : i32
    return %arg0, %c0_i32 : i32, i32
  }
  func.func @transform_1(%arg0: i32) -> (i32, i32) {
    %c0_i32 = arith.constant 0 : i32
    %c0_i32_0 = arith.constant 0 : i32
    %c0_i32_1 = arith.constant 0 : i32
    return %c0_i32, %c0_i32_0 : i32, i32
  }
  func.func @transform_2(%arg0: i32) -> (i32, i32) {
    %c0_i32 = arith.constant 0 : i32
    %c0_i32_0 = arith.constant 0 : i32
    %c0_i32_1 = arith.constant 0 : i32
    return %c0_i32, %c0_i32_0 : i32, i32
  }
  func.func @transform_3(%arg0: i32) -> (i32, i32) {
    %c0_i32 = arith.constant 0 : i32
    %c0_i32_0 = arith.constant 0 : i32
    return %arg0, %c0_i32 : i32, i32
  }
  func.func @transform_4(%arg0: i32) -> (i32, i32) {
    %c0_i32 = arith.constant 0 : i32
    %c0_i32_0 = arith.constant 0 : i32
    return %arg0, %c0_i32 : i32, i32
  }
}

module attributes {stable_mosaic.version = 11 : i64} {
  func.func @_gemm_bias_kernel(%arg0: i32, %arg1: memref<64x32xf32, #tpu.memory_space<vmem>>, %arg2: memref<32x32xf32, #tpu.memory_space<vmem>>, %arg3: memref<1x32xf32, #tpu.memory_space<vmem>>, %arg4: memref<64x32xf32, #tpu.memory_space<vmem>>, %arg5: memref<64x32xf32, #tpu.memory_space<vmem>>) attributes {dimension_semantics = [#tpu.dimension_semantics<parallel>], iteration_bounds = array<i64: 1>, scalar_prefetch = 0 : i64, scratch_operands = 0 : i64, tpu.core_type = #tpu.core_type<tc>, window_params = [{transform_indices = @transform_0, window_bounds = array<i64: 64, 32>}, {pipeline_mode = #tpu.pipeline_mode<synchronous>, transform_indices = @transform_1, window_bounds = array<i64: 32, 32>}, {pipeline_mode = #tpu.pipeline_mode<synchronous>, transform_indices = @transform_2, window_bounds = array<i64: 1, 32>}, {transform_indices = @transform_3, window_bounds = array<i64: 64, 32>}, {transform_indices = @transform_4, window_bounds = array<i64: 64, 32>}]} {
    %c0 = arith.constant 0 : index
    %c0_0 = arith.constant 0 : index
    %0 = vector.load %arg1[%c0, %c0_0] : memref<64x32xf32, #tpu.memory_space<vmem>>, vector<64x32xf32>
    %c0_1 = arith.constant 0 : index
    %c0_2 = arith.constant 0 : index
    %1 = vector.load %arg2[%c0_1, %c0_2] : memref<32x32xf32, #tpu.memory_space<vmem>>, vector<32x32xf32>
    %cst = arith.constant dense<0.000000e+00> : vector<64x32xf32>
    %2 = tpu.matmul %0, %1, %cst {dimension_numbers = #tpu.dot_dimension_numbers<[1], [0], [0], [1], [0, 0, 1, 1], [], []>} : vector<64x32xf32>, vector<32x32xf32>, vector<64x32xf32> -> vector<64x32xf32>
    %c0_3 = arith.constant 0 : index
    %c0_4 = arith.constant 0 : index
    %3 = vector.load %arg3[%c0_3, %c0_4] : memref<1x32xf32, #tpu.memory_space<vmem>>, vector<1x32xf32>
    %4 = vector.broadcast %3 : vector<1x32xf32> to vector<64x32xf32>
    %5 = arith.addf %2, %4 : vector<64x32xf32>
    %c0_5 = arith.constant 0 : index
    %c0_6 = arith.constant 0 : index
    %6 = vector.load %arg4[%c0_5, %c0_6] : memref<64x32xf32, #tpu.memory_space<vmem>>, vector<64x32xf32>
    %7 = arith.addf %5, %6 : vector<64x32xf32>
    %c0_7 = arith.constant 0 : index
    %c0_8 = arith.constant 0 : index
    %8 = vector.load %arg5[%c0_7, %c0_8] : memref<64x32xf32, #tpu.memory_space<vmem>>, vector<64x32xf32>
    tpu.vector_store %arg5[%c0_7, %c0_8], %7 {strides = array<i32>} : memref<64x32xf32, #tpu.memory_space<vmem>>, vector<64x32xf32>,
    return
  }
  func.func @transform_0(%arg0: i32) -> (i32, i32) {
    %c0_i32 = arith.constant 0 : i32
    %c0_i32_0 = arith.constant 0 : i32
    return %arg0, %c0_i32 : i32, i32
  }
  func.func @transform_1(%arg0: i32) -> (i32, i32) {
    %c0_i32 = arith.constant 0 : i32
    %c0_i32_0 = arith.constant 0 : i32
    %c0_i32_1 = arith.constant 0 : i32
    return %c0_i32, %c0_i32_0 : i32, i32
  }
  func.func @transform_2(%arg0: i32) -> (i32, i32) {
    %c0_i32 = arith.constant 0 : i32
    %c0_i32_0 = arith.constant 0 : i32
    %c0_i32_1 = arith.constant 0 : i32
    return %c0_i32, %c0_i32_0 : i32, i32
  }
  func.func @transform_3(%arg0: i32) -> (i32, i32) {
    %c0_i32 = arith.constant 0 : i32
    %c0_i32_0 = arith.constant 0 : i32
    return %arg0, %c0_i32 : i32, i32
  }
  func.func @transform_4(%arg0: i32) -> (i32, i32) {
    %c0_i32 = arith.constant 0 : i32
    %c0_i32_0 = arith.constant 0 : i32
    return %arg0, %c0_i32 : i32, i32
  }
}

</mosaic_0001>

<llo_original>
// kernel: encoder_forward.6
$region0: #{encoder_forward.6}
  #allocation0 [shape = 'u32[]', space=smem, size = 0x4, offset = 0x4, fixed_abs, tag = 'smem constant byte address 0x4 - core index']
  #allocation1 [shape = 'u32[144,128]{1,0:T(1,128)}', space=vmem, size = 0x12000, scoped, tag = 'internal scratch']
  %s0 = inlined_call_operand.vmem [shape: f32[256,64], index: 0, kind: input, shape index: {}]
  %s1 = inlined_call_operand.vmem [shape: f32[64,32], index: 1, kind: input, shape index: {}]
  %s2 = inlined_call_operand.vmem [shape: f32[1,32], index: 2, kind: input, shape index: {}]
  %s3 = inlined_call_operand.vmem [shape: f32[256,32], index: 3, kind: output, shape index: {}]
  %s4 = sld [smem:[#allocation0]]
  $region45: #{encoder_forward.6} parent=0
    _
  %s6 = ssub.s32 1, %s4
  %s7 = scalar_select 0, %s6, %s4
  loop: start=0, step=1, limit=4
  $region2: #{encoder_forward.6} parent=0 // loop_pre_header
    _
  $region3: #{encoder_forward.6} parent=0 // loop_header
    %s9 = sphi 0, %s13
    %p10 = scmp.ge.s32.totalorder %s9, 4
    %s19 = sphi 0, %s21
    %s22 = sphi 0, %s19
    %s23 = sphi 0, %s22
    %s39 = sphi 0, %s23
    %s43 = sphi 0, %s43
    %s45 = sphi 0, %s43
    %s46 = sphi 0, %s45
    %s60 = sphi 0, %s46
    %s64 = sphi 0, %s64
    %s66 = sphi 0, %s64
    %s67 = sphi 0, %s66
    %s81 = sphi 0, %s67
    %s87 = sphi 0, %s89
    %s90 = sphi 0, %s87
    %s91 = sphi 0, %s90
    %s107 = sphi 0, %s91
  $region4: #{encoder_forward.6} parent=0 // loop_header_branch
    %12 = sbr.rel (%p10) target = $region8
  $region5: #{encoder_forward.6} parent=0 // loop_body
    %s14 = ssub.s32 %s9, 1
    %s15 = ssub.s32 %s9, 2
    %s16 = sadd.s32 %s9, 1
    %s17 = ssub.s32 %s9, %s16
    %p18 = scmp.eq.s32.totalorder %s17, 0
    %s20 = sadd.s32 %s19, 1
    %s21 = scalar_select %p18, %s19, %s20
    %p24 = pneg %p18
    %p25 = scmp.eq.s32.totalorder %s9, 1
    %p26 = por %p24, %p25
    %p27 = scmp.ne.s32.totalorder %s19, %s22
    %p28 = scmp.eq.s32.totalorder %s9, 0
    %p29 = por %p27, %p28
    %p30 = scmp.ne.s32.totalorder %s19, %s22
    %p31 = scmp.eq.s32.totalorder %s14, 1
    %p32 = por %p30, %p31
    %p33 = scmp.ne.s32.totalorder %s22, %s23
    %p34 = scmp.eq.s32.totalorder %s14, 0
    %p35 = por %p33, %p34
    %p36 = scmp.ne.s32.totalorder %s22, %s23
    %p37 = scmp.eq.s32.totalorder %s15, 1
    %p38 = por %p36, %p37
    %p40 = scmp.ne.s32.totalorder %s23, %s39
    %p41 = scmp.eq.s32.totalorder %s15, 0
    %p42 = por %p40, %p41
    %s44 = sadd.s32 %s43, 1
    %p47 = scmp.eq.s32.totalorder %s9, 1
    %p48 = scmp.ne.s32.totalorder %s43, %s45
    %p49 = scmp.eq.s32.totalorder %s9, 0
    %p50 = por %p48, %p49
    %p51 = scmp.ne.s32.totalorder %s43, %s45
    %p52 = scmp.eq.s32.totalorder %s14, 1
    %p53 = por %p51, %p52
    %p54 = scmp.ne.s32.totalorder %s45, %s46
    %p55 = scmp.eq.s32.totalorder %s14, 0
    %p56 = por %p54, %p55
    %p57 = scmp.ne.s32.totalorder %s45, %s46
    %p58 = scmp.eq.s32.totalorder %s15, 1
    %p59 = por %p57, %p58
    %p61 = scmp.ne.s32.totalorder %s46, %s60
    %p62 = scmp.eq.s32.totalorder %s15, 0
    %p63 = por %p61, %p62
    %s65 = sadd.s32 %s64, 1
    %p68 = scmp.eq.s32.totalorder %s9, 1
    %p69 = scmp.ne.s32.totalorder %s64, %s66
    %p70 = scmp.eq.s32.totalorder %s9, 0
    %p71 = por %p69, %p70
    %p72 = scmp.ne.s32.totalorder %s64, %s66
    %p73 = scmp.eq.s32.totalorder %s14, 1
    %p74 = por %p72, %p73
    %p75 = scmp.ne.s32.totalorder %s66, %s67
    %p76 = scmp.eq.s32.totalorder %s14, 0
    %p77 = por %p75, %p76
    %p78 = scmp.ne.s32.totalorder %s66, %s67
    %p79 = scmp.eq.s32.totalorder %s15, 1
    %p80 = por %p78, %p79
    %p82 = scmp.ne.s32.totalorder %s67, %s81
    %p83 = scmp.eq.s32.totalorder %s15, 0
    %p84 = por %p82, %p83
    %s85 = ssub.s32 %s9, %s16
    %p86 = scmp.eq.s32.totalorder %s85, 0
    %s88 = sadd.s32 %s87, 1
    %s89 = scalar_select %p86, %s87, %s88
    %p92 = pneg %p86
    %p93 = scmp.eq.s32.totalorder %s9, 1
    %p94 = por %p92, %p93
    %p95 = scmp.ne.s32.totalorder %s87, %s90
    %p96 = scmp.eq.s32.totalorder %s9, 0
    %p97 = por %p95, %p96
    %p98 = scmp.ne.s32.totalorder %s87, %s90
    %p99 = scmp.eq.s32.totalorder %s14, 1
    %p100 = por %p98, %p99
    %p101 = scmp.ne.s32.totalorder %s90, %s91
    %p102 = scmp.eq.s32.totalorder %s14, 0
    %p103 = por %p101, %p102
    %p104 = scmp.ne.s32.totalorder %s90, %s91
    %p105 = scmp.eq.s32.totalorder %s15, 1
    %p106 = por %p104, %p105
    %p108 = scmp.ne.s32.totalorder %s91, %s107
    %p109 = scmp.eq.s32.totalorder %s15, 0
    %p110 = por %p108, %p109
    %p111 = scmp.le.s32.totalorder 1, %s9
    %p112 = scmp.lt.s32.totalorder %s9, 3
    %p113 = pnand %p111, %p112
    %p114 = pneg %p113
    // Predicated region
    $region9: #{encoder_forward.6} parent=5 // pred_check
      _
    $region10: #{encoder_forward.6} parent=5 // pred_check_branch
      %116 = sbr.rel (%p113) target = $region12
    $region11: #{encoder_forward.6} parent=5 // pred_region
      %s117 = ssub.s32 %s9, 1
      // Predicated region
      $region13: #{encoder_forward.6} parent=11 // pred_check
        %p118 = pneg %p56
      $region14: #{encoder_forward.6} parent=11 // pred_check_branch
        %120 = sbr.rel (%p118) target = $region16
      $region15: #{encoder_forward.6} parent=11 // pred_region
        _
      $region16: #{encoder_forward.6} parent=11 // pred_fallthru
        _
      // Predicated region
      $region17: #{encoder_forward.6} parent=11 // pred_check
        %p121 = pneg %p77
      $region18: #{encoder_forward.6} parent=11 // pred_check_branch
        %123 = sbr.rel (%p121) target = $region20
      $region19: #{encoder_forward.6} parent=11 // pred_region
        _
      $region20: #{encoder_forward.6} parent=11 // pred_fallthru
        _
    $region12: #{encoder_forward.6} parent=5 // pred_fallthru
      _
    %p124 = scmp.lt.s32.totalorder %s9, 2
    // Predicated region
    $region21: #{encoder_forward.6} parent=5 // pred_check
      %p125 = pneg %p124
    $region22: #{encoder_forward.6} parent=5 // pred_check_branch
      %127 = sbr.rel (%p125) target = $region24
    $region23: #{encoder_forward.6} parent=5 // pred_region
      // Predicated region
      $region25: #{encoder_forward.6} parent=23 // pred_check
        %p128 = pneg %p29
      $region26: #{encoder_forward.6} parent=23 // pred_check_branch
        %130 = sbr.rel (%p128) target = $region28
      $region27: #{encoder_forward.6} parent=23 // pred_region
        %s131 = smul.u32 16, %s9
        %p132 = scmp.lt.s32.totalorder %s131, 31
        %s133 = scalar_select %p132, %s131, 31
        %s134 = smul.addr %s133, 8
        %s135 = scalar_lea.vmem %s0, %s134
        %s136 = smul.u32 16, %s9
      $region28: #{encoder_forward.6} parent=23 // pred_fallthru
        _
    $region24: #{encoder_forward.6} parent=5 // pred_fallthru
      _
    %p137 = scmp.le.s32.totalorder 1, %s9
    %p138 = scmp.lt.s32.totalorder %s9, 3
    %p139 = pnand %p137, %p138
    %p140 = pneg %p139
    // Predicated region
    $region29: #{encoder_forward.6} parent=5 // pred_check
      _
    $region30: #{encoder_forward.6} parent=5 // pred_check_branch
      %142 = sbr.rel (%p139) target = $region32
    $region31: #{encoder_forward.6} parent=5 // pred_region
      %s143 = ssub.s32 %s9, 1
      %s144 = smul.u32 16, %s14
      %p145 = scmp.lt.s32.totalorder %s144, 31
      %s146 = scalar_select %p145, %s144, 31
      %s147 = smul.addr %s146, 8
      %s148 = scalar_lea.vmem %s0, %s147
      %p149 = pneg %p35
      %p150 = pneg %p32
      %p151 = pneg %p56
      %p152 = pneg %p53
      %p153 = pneg %p77
      %p154 = pneg %p74
      %p155 = pneg %p103
      %p156 = pneg %p100
      %s157 = smul.u32 16, %s14
      %p158 = scmp.lt.s32.totalorder %s157, 31
      %s159 = scalar_select %p158, %s157, 31
      %s160 = smul.addr %s159, 8
      %s161 = scalar_lea.vmem %s3, %s160
      %s162 = smul.u32 16, %s14
      %p163 = scmp.lt.s32.totalorder %s162, 31
      %s164 = scalar_select %p163, %s162, 31
      %s165 = smul.addr %s164, 8
      %s166 = scalar_lea.vmem %s0, %s165
      %s167 = smul.u32 16, %s14
      %s168 = smul.u32 16, %s14
      %p169 = scmp.lt.s32.totalorder %s168, 31
      %s170 = scalar_select %p169, %s168, 31
      %s171 = smul.addr %s170, 8
      %s172 = scalar_lea.vmem %s3, %s171
      %s173 = smul.u32 16, %s14
      %v174 = vld [vmem:[%s166] sm:$0xff]
      %v175 = vld [vmem:[%s166 + $0x8] sm:$0xff]
      %v176 = vld [vmem:[%s166 + $0x10] sm:$0xff]
      %v177 = vld [vmem:[%s166 + $0x18] sm:$0xff]
      %v178 = vld [vmem:[%s166 + $0x20] sm:$0xff]
      %v179 = vld [vmem:[%s166 + $0x28] sm:$0xff]
      %v180 = vld [vmem:[%s166 + $0x30] sm:$0xff]
      %v181 = vld [vmem:[%s166 + $0x38] sm:$0xff]
      %v182 = vld [vmem:[%s166 + $0x40] sm:$0xff]
      %v183 = vld [vmem:[%s166 + $0x48] sm:$0xff]
      %v184 = vld [vmem:[%s166 + $0x50] sm:$0xff]
      %v185 = vld [vmem:[%s166 + $0x58] sm:$0xff]
      %v186 = vld [vmem:[%s166 + $0x60] sm:$0xff]
      %v187 = vld [vmem:[%s166 + $0x68] sm:$0xff]
      %v188 = vld [vmem:[%s166 + $0x70] sm:$0xff]
      %v189 = vld [vmem:[%s166 + $0x78] sm:$0xff]
      %v190 = vld [vmem:[%s1] sm:$0xff]
      %v191 = vld [vmem:[%s1 + $0x8] sm:$0xff]
      %v192 = vld [vmem:[%s1 + $0x10] sm:$0xff]
      %v193 = vld [vmem:[%s1 + $0x18] sm:$0xff]
      %v194 = vld [vmem:[%s1 + $0x20] sm:$0xff]
      %v195 = vld [vmem:[%s1 + $0x28] sm:$0xff]
      %v196 = vld [vmem:[%s1 + $0x30] sm:$0xff]
      %v197 = vld [vmem:[%s1 + $0x38] sm:$0xff]
      %v198 = vld [vmem:[%s2] sm:$0x1]
      %v200 = vlaneseq
      %v201 = vshrl.u32 %v200, 7
      %v202 = vsub.s32 0, %v201
      %v203 = vrot.slane %v198, %v202
      %vm205 = vcmask 523264
      %v207 = vsel %vm205, %v174, 0
      %v210 = vsel %vm205, %v175, 0
      %v213 = vsel %vm205, %v176, 0
      %v216 = vsel %vm205, %v177, 0
      %v219 = vsel %vm205, %v178, 0
      %v222 = vsel %vm205, %v179, 0
      %v225 = vsel %vm205, %v180, 0
      %v228 = vsel %vm205, %v181, 0
      %v231 = vsel %vm205, %v182, 0
      %v234 = vsel %vm205, %v183, 0
      %v237 = vsel %vm205, %v184, 0
      %v240 = vsel %vm205, %v185, 0
      %v243 = vsel %vm205, %v186, 0
      %v246 = vsel %vm205, %v187, 0
      %v249 = vsel %vm205, %v188, 0
      %v252 = vsel %vm205, %v189, 0
      %254 = vmatprep.subr.mxu0 0.0
      %255 = vmatpush1.msra.mxu0 %v190
      %256 = vmatprep.subr.mxu0 0.0
      %257 = vmatpush1.msra.mxu0 %v191
      %258 = vmatprep.subr.mxu0 0.0
      %259 = vmatpush1.msra.mxu0 %v192
      %260 = vmatprep.subr.mxu0 0.0
      %261 = vmatpush1.msra.mxu0 %v193
      %262 = vmatprep.subr.mxu0 0.0
      %263 = vmatpush1.msra.mxu0 %v194
      %264 = vmatprep.subr.mxu0 0.0
      %265 = vmatpush1.msra.mxu0 %v195
      %266 = vmatprep.subr.mxu0 0.0
      %267 = vmatpush1.msra.mxu0 %v196
      %268 = vmatprep.subr.mxu0 0.0
      %269 = vmatpush1.msra.mxu0 %v197
      %270 = vmatprep.subr.mxu0 0.0
      %271 = vmatpush1.msra.mxu0 0.0
      %272 = vmatprep.subr.mxu0 0.0
      %273 = vmatpush1.msra.mxu0 0.0
      %274 = vmatprep.subr.mxu0 0.0
      %275 = vmatpush1.msra.mxu0 0.0
      %276 = vmatprep.subr.mxu0 0.0
      %277 = vmatpush1.msra.mxu0 0.0
      %278 = vmatprep.subr.mxu0 0.0
      %279 = vmatpush1.msra.mxu0 0.0
      %280 = vmatprep.subr.mxu0 0.0
      %281 = vmatpush1.msra.mxu0 0.0
      %282 = vmatprep.subr.mxu0 0.0
      %283 = vmatpush1.msra.mxu0 0.0
      %284 = vmatprep.subr.mxu0 0.0
      %285 = vmatpush1.msra.mxu0 0.0
      %286 = vmatprep.subr.mxu0 0.0
      %287 = vmatpush1.msra.mxu0 0.0
      %288 = vmatprep.subr.mxu0 0.0
      %289 = vmatpush1.msra.mxu0 0.0
      %290 = vmatprep.subr.mxu0 0.0
      %291 = vmatpush1.msra.mxu0 0.0
      %292 = vmatprep.subr.mxu0 0.0
      %293 = vmatpush1.msra.mxu0 0.0
      %294 = vmatprep.subr.mxu0 0.0
      %295 = vmatpush1.msra.mxu0 0.0
      %296 = vmatprep.subr.mxu0 0.0
      %297 = vmatpush1.msra.mxu0 0.0
      %298 = vmatprep.subr.mxu0 0.0
      %299 = vmatpush1.msra.mxu0 0.0
      %300 = vmatprep.subr.mxu0 0.0
      %301 = vmatpush1.msra.mxu0 0.0
      %302 = vmatprep.subr.mxu0 0.0
      %303 = vmatpush1.msra.mxu0 0.0
      %304 = vmatprep.subr.mxu0 0.0
      %305 = vmatpush1.msra.mxu0 0.0
      %306 = vmatprep.subr.mxu0 0.0
      %307 = vmatpush1.msra.mxu0 0.0
      %308 = vmatprep.subr.mxu0 0.0
      %309 = vmatpush1.msra.mxu0 0.0
      %310 = vmatprep.subr.mxu0 0.0
      %311 = vmatpush1.msra.mxu0 0.0
      %312 = vmatprep.subr.mxu0 0.0
      %313 = vmatpush1.msra.mxu0 0.0
      %314 = vmatprep.subr.mxu0 0.0
      %315 = vmatpush1.msra.mxu0 0.0
      %316 = vmatprep.subr.mxu0 0.0
      %317 = vmatpush1.msra.mxu0 0.0
      %318 = vmatprep.mubr.f32.mxu0 0.0
      %319 = vmatmul.mubr.f32.gmra.mrb[0].mxu0 %v207
      %v320 = vpop.f32.mrb[0].mxu0
      %v321 = vadd.f32 %v203, %v320
      %v322 = vpop.f32.mrb[0].mxu0
      %323 = vmatprep.mubr.f32.mxu0 0.0
      %324 = vmatmul.mubr.f32.gmra.mrb[0].mxu0 %v210
      %v325 = vpop.f32.mrb[0].mxu0
      %v326 = vadd.f32 %v203, %v325
      %v327 = vpop.f32.mrb[0].mxu0
      %328 = vmatprep.mubr.f32.mxu0 0.0
      %329 = vmatmul.mubr.f32.gmra.mrb[0].mxu0 %v213
      %v330 = vpop.f32.mrb[0].mxu0
      %v331 = vadd.f32 %v203, %v330
      %v332 = vpop.f32.mrb[0].mxu0
      %333 = vmatprep.mubr.f32.mxu0 0.0
      %334 = vmatmul.mubr.f32.gmra.mrb[0].mxu0 %v216
      %v335 = vpop.f32.mrb[0].mxu0
      %v336 = vadd.f32 %v203, %v335
      %v337 = vpop.f32.mrb[0].mxu0
      %338 = vmatprep.mubr.f32.mxu0 0.0
      %339 = vmatmul.mubr.f32.gmra.mrb[0].mxu0 %v219
      %v340 = vpop.f32.mrb[0].mxu0
      %v341 = vadd.f32 %v203, %v340
      %v342 = vpop.f32.mrb[0].mxu0
      %343 = vmatprep.mubr.f32.mxu0 0.0
      %344 = vmatmul.mubr.f32.gmra.mrb[0].mxu0 %v222
      %v345 = vpop.f32.mrb[0].mxu0
      %v346 = vadd.f32 %v203, %v345
      %v347 = vpop.f32.mrb[0].mxu0
      %348 = vmatprep.mubr.f32.mxu0 0.0
      %349 = vmatmul.mubr.f32.gmra.mrb[0].mxu0 %v225
      %v350 = vpop.f32.mrb[0].mxu0
      %v351 = vadd.f32 %v203, %v350
      %v352 = vpop.f32.mrb[0].mxu0
      %353 = vmatprep.mubr.f32.mxu0 0.0
      %354 = vmatmul.mubr.f32.gmra.mrb[0].mxu0 %v228
      %v355 = vpop.f32.mrb[0].mxu0
      %v356 = vadd.f32 %v203, %v355
      %v357 = vpop.f32.mrb[0].mxu0
      %358 = vmatprep.mubr.f32.mxu0 0.0
      %359 = vmatmul.mubr.f32.gmra.mrb[0].mxu0 %v231
      %v360 = vpop.f32.mrb[0].mxu0
      %v361 = vadd.f32 %v203, %v360
      %v362 = vpop.f32.mrb[0].mxu0
      %363 = vmatprep.mubr.f32.mxu0 0.0
      %364 = vmatmul.mubr.f32.gmra.mrb[0].mxu0 %v234
      %v365 = vpop.f32.mrb[0].mxu0
      %v366 = vadd.f32 %v203, %v365
      %v367 = vpop.f32.mrb[0].mxu0
      %368 = vmatprep.mubr.f32.mxu0 0.0
      %369 = vmatmul.mubr.f32.gmra.mrb[0].mxu0 %v237
      %v370 = vpop.f32.mrb[0].mxu0
      %v371 = vadd.f32 %v203, %v370
      %v372 = vpop.f32.mrb[0].mxu0
      %373 = vmatprep.mubr.f32.mxu0 0.0
      %374 = vmatmul.mubr.f32.gmra.mrb[0].mxu0 %v240
      %v375 = vpop.f32.mrb[0].mxu0
      %v376 = vadd.f32 %v203, %v375
      %v377 = vpop.f32.mrb[0].mxu0
      %378 = vmatprep.mubr.f32.mxu0 0.0
      %379 = vmatmul.mubr.f32.gmra.mrb[0].mxu0 %v243
      %v380 = vpop.f32.mrb[0].mxu0
      %v381 = vadd.f32 %v203, %v380
      %v382 = vpop.f32.mrb[0].mxu0
      %383 = vmatprep.mubr.f32.mxu0 0.0
      %384 = vmatmul.mubr.f32.gmra.mrb[0].mxu0 %v246
      %v385 = vpop.f32.mrb[0].mxu0
      %v386 = vadd.f32 %v203, %v385
      %v387 = vpop.f32.mrb[0].mxu0
      %388 = vmatprep.mubr.f32.mxu0 0.0
      %389 = vmatmul.mubr.f32.gmra.mrb[0].mxu0 %v249
      %v390 = vpop.f32.mrb[0].mxu0
      %v391 = vadd.f32 %v203, %v390
      %v392 = vpop.f32.mrb[0].mxu0
      %393 = vmatprep.mubr.f32.mxu0 0.0
      %394 = vmatmul.mubr.f32.gmra.mrb[0].mxu0 %v252
      %v395 = vpop.f32.mrb[0].mxu0
      %v396 = vadd.f32 %v203, %v395
      %v397 = vpop.f32.mrb[0].mxu0
      %398 = vdwg.mxu0
      %v399 = vmax.f32 %v321, 0.0
      %v400 = vmax.f32 %v326, 0.0
      %v401 = vmax.f32 %v331, 0.0
      %v402 = vmax.f32 %v336, 0.0
      %v403 = vmax.f32 %v341, 0.0
      %v404 = vmax.f32 %v346, 0.0
      %v405 = vmax.f32 %v351, 0.0
      %v406 = vmax.f32 %v356, 0.0
      %v407 = vmax.f32 %v361, 0.0
      %v408 = vmax.f32 %v366, 0.0
      %v409 = vmax.f32 %v371, 0.0
      %v410 = vmax.f32 %v376, 0.0
      %v411 = vmax.f32 %v381, 0.0
      %v412 = vmax.f32 %v386, 0.0
      %v413 = vmax.f32 %v391, 0.0
      %v414 = vmax.f32 %v396, 0.0
      %vm415 = vcmask 261120
      %416 = vst.msk [vmem:[%s172] sm:$0xff] %vm415, %v399
      %417 = vst.msk [vmem:[%s172 + $0x8] sm:$0xff] %vm415, %v400
      %418 = vst.msk [vmem:[%s172 + $0x10] sm:$0xff] %vm415, %v401
      %419 = vst.msk [vmem:[%s172 + $0x18] sm:$0xff] %vm415, %v402
      %420 = vst.msk [vmem:[%s172 + $0x20] sm:$0xff] %vm415, %v403
      %421 = vst.msk [vmem:[%s172 + $0x28] sm:$0xff] %vm415, %v404
      %422 = vst.msk [vmem:[%s172 + $0x30] sm:$0xff] %vm415, %v405
      %423 = vst.msk [vmem:[%s172 + $0x38] sm:$0xff] %vm415, %v406
      %424 = vst.msk [vmem:[%s172 + $0x40] sm:$0xff] %vm415, %v407
      %425 = vst.msk [vmem:[%s172 + $0x48] sm:$0xff] %vm415, %v408
      %426 = vst.msk [vmem:[%s172 + $0x50] sm:$0xff] %vm415, %v409
      %427 = vst.msk [vmem:[%s172 + $0x58] sm:$0xff] %vm415, %v410
      %428 = vst.msk [vmem:[%s172 + $0x60] sm:$0xff] %vm415, %v411
      %429 = vst.msk [vmem:[%s172 + $0x68] sm:$0xff] %vm415, %v412
      %430 = vst.msk [vmem:[%s172 + $0x70] sm:$0xff] %vm415, %v413
      %431 = vst.msk [vmem:[%s172 + $0x78] sm:$0xff] %vm415, %v414
      %s432 = smul.u32 16, %s14
      %p433 = scmp.lt.s32.totalorder %s432, 31
      %s434 = scalar_select %p433, %s432, 31
      %s435 = smul.addr %s434, 8
      %s436 = scalar_lea.vmem %s3, %s435
      // Predicated region
      $region33: #{encoder_forward.6} parent=31 // pred_check
        %p437 = pneg %p100
      $region34: #{encoder_forward.6} parent=31 // pred_check_branch
        %439 = sbr.rel (%p437) target = $region36
      $region35: #{encoder_forward.6} parent=31 // pred_region
        %s440 = smul.u32 16, %s14
      $region36: #{encoder_forward.6} parent=31 // pred_fallthru
        _
    $region32: #{encoder_forward.6} parent=5 // pred_fallthru
      _
    %p441 = scmp.le.s32.totalorder 2, %s9
    // Predicated region
    $region37: #{encoder_forward.6} parent=5 // pred_check
      %p442 = pneg %p441
    $region38: #{encoder_forward.6} parent=5 // pred_check_branch
      %444 = sbr.rel (%p442) target = $region40
    $region39: #{encoder_forward.6} parent=5 // pred_region
      %s445 = ssub.s32 %s9, 2
      // Predicated region
      $region41: #{encoder_forward.6} parent=39 // pred_check
        %p446 = pneg %p106
      $region42: #{encoder_forward.6} parent=39 // pred_check_branch
        %448 = sbr.rel (%p446) target = $region44
      $region43: #{encoder_forward.6} parent=39 // pred_region
        %s449 = smul.u32 16, %s15
        %p450 = scmp.lt.s32.totalorder %s449, 31
        %s451 = scalar_select %p450, %s449, 31
        %s452 = smul.addr %s451, 8
        %s453 = scalar_lea.vmem %s3, %s452
      $region44: #{encoder_forward.6} parent=39 // pred_fallthru
        _
    $region40: #{encoder_forward.6} parent=5 // pred_fallthru
      _
  $region6: #{encoder_forward.6} parent=0 // loop_footer
    %s13 = sadd.s32 1, %s9
  $region7: #{encoder_forward.6} parent=0 // loop_footer_branch
    %8 = sbr.rel target = $region3
  $region8: #{encoder_forward.6} parent=0 // loop_exit
    _

// kernel: encoder_forward.7
$region0: #{encoder_forward.7}
  #allocation0 [shape = 'u32[]', space=smem, size = 0x4, offset = 0x4, fixed_abs, tag = 'smem constant byte address 0x4 - core index']
  #allocation1 [shape = 'u32[144,128]{1,0:T(1,128)}', space=vmem, size = 0x12000, scoped, tag = 'internal scratch']
  %s0 = inlined_call_operand.vmem [shape: f32[64,512], index: 0, kind: input, shape index: {}]
  %s1 = inlined_call_operand.vmem [shape: f32[512,32], index: 1, kind: input, shape index: {}]
  %s2 = inlined_call_operand.vmem [shape: f32[1,32], index: 2, kind: input, shape index: {}]
  %s3 = inlined_call_operand.vmem [shape: f32[64,32], index: 3, kind: output, shape index: {}]
  %s4 = sld [smem:[#allocation0]]
  $region22: #{encoder_forward.7} parent=0
    _
  %s6 = ssub.s32 1, %s4
  %s7 = scalar_select 0, %s6, %s4
  // Predicated region
  $region2: #{encoder_forward.7} parent=0 // pred_check
    _
  $region3: #{encoder_forward.7} parent=0 // pred_check_branch
    %9 = sbr.rel (0) target = $region5
  $region4: #{encoder_forward.7} parent=0 // pred_region
    _
  $region5: #{encoder_forward.7} parent=0 // pred_fallthru
    _
  // Predicated region
  $region6: #{encoder_forward.7} parent=0 // pred_check
    _
  $region7: #{encoder_forward.7} parent=0 // pred_check_branch
    %11 = sbr.rel (0) target = $region9
  $region8: #{encoder_forward.7} parent=0 // pred_region
    _
  $region9: #{encoder_forward.7} parent=0 // pred_fallthru
    _
  // Predicated region
  $region10: #{encoder_forward.7} parent=0 // pred_check
    _
  $region11: #{encoder_forward.7} parent=0 // pred_check_branch
    %13 = sbr.rel (0) target = $region13
  $region12: #{encoder_forward.7} parent=0 // pred_region
    _
  $region13: #{encoder_forward.7} parent=0 // pred_fallthru
    _
  %v14 = vld [vmem:[%s0] sm:$0xff]
  %v15 = vld [vmem:[%s0 + $0x8] sm:$0xff]
  %v16 = vld [vmem:[%s0 + $0x10] sm:$0xff]
  %v17 = vld [vmem:[%s0 + $0x18] sm:$0xff]
  %v18 = vld [vmem:[%s0 + $0x20] sm:$0xff]
  %v19 = vld [vmem:[%s0 + $0x28] sm:$0xff]
  %v20 = vld [vmem:[%s0 + $0x30] sm:$0xff]
  %v21 = vld [vmem:[%s0 + $0x38] sm:$0xff]
  %v22 = vld [vmem:[%s0 + $0x40] sm:$0xff]
  %v23 = vld [vmem:[%s0 + $0x48] sm:$0xff]
  %v24 = vld [vmem:[%s0 + $0x50] sm:$0xff]
  %v25 = vld [vmem:[%s0 + $0x58] sm:$0xff]
  %v26 = vld [vmem:[%s0 + $0x60] sm:$0xff]
  %v27 = vld [vmem:[%s0 + $0x68] sm:$0xff]
  %v28 = vld [vmem:[%s0 + $0x70] sm:$0xff]
  %v29 = vld [vmem:[%s0 + $0x78] sm:$0xff]
  %v30 = vld [vmem:[%s0 + $0x80] sm:$0xff]
  %v31 = vld [vmem:[%s0 + $0x88] sm:$0xff]
  %v32 = vld [vmem:[%s0 + $0x90] sm:$0xff]
  %v33 = vld [vmem:[%s0 + $0x98] sm:$0xff]
  %v34 = vld [vmem:[%s0 + $0xa0] sm:$0xff]
  %v35 = vld [vmem:[%s0 + $0xa8] sm:$0xff]
  %v36 = vld [vmem:[%s0 + $0xb0] sm:$0xff]
  %v37 = vld [vmem:[%s0 + $0xb8] sm:$0xff]
  %v38 = vld [vmem:[%s0 + $0xc0] sm:$0xff]
  %v39 = vld [vmem:[%s0 + $0xc8] sm:$0xff]
  %v40 = vld [vmem:[%s0 + $0xd0] sm:$0xff]
  %v41 = vld [vmem:[%s0 + $0xd8] sm:$0xff]
  %v42 = vld [vmem:[%s0 + $0xe0] sm:$0xff]
  %v43 = vld [vmem:[%s0 + $0xe8] sm:$0xff]
  %v44 = vld [vmem:[%s0 + $0xf0] sm:$0xff]
  %v45 = vld [vmem:[%s0 + $0xf8] sm:$0xff]
  %v46 = vld [vmem:[%s1] sm:$0xff]
  %v47 = vld [vmem:[%s1 + $0x8] sm:$0xff]
  %v48 = vld [vmem:[%s1 + $0x10] sm:$0xff]
  %v49 = vld [vmem:[%s1 + $0x18] sm:$0xff]
  %v50 = vld [vmem:[%s1 + $0x20] sm:$0xff]
  %v51 = vld [vmem:[%s1 + $0x28] sm:$0xff]
  %v52 = vld [vmem:[%s1 + $0x30] sm:$0xff]
  %v53 = vld [vmem:[%s1 + $0x38] sm:$0xff]
  %v54 = vld [vmem:[%s1 + $0x40] sm:$0xff]
  %v55 = vld [vmem:[%s1 + $0x48] sm:$0xff]
  %v56 = vld [vmem:[%s1 + $0x50] sm:$0xff]
  %v57 = vld [vmem:[%s1 + $0x58] sm:$0xff]
  %v58 = vld [vmem:[%s1 + $0x60] sm:$0xff]
  %v59 = vld [vmem:[%s1 + $0x68] sm:$0xff]
  %v60 = vld [vmem:[%s1 + $0x70] sm:$0xff]
  %v61 = vld [vmem:[%s1 + $0x78] sm:$0xff]
  %v62 = vld [vmem:[%s1 + $0x80] sm:$0xff]
  %v63 = vld [vmem:[%s1 + $0x88] sm:$0xff]
  %v64 = vld [vmem:[%s1 + $0x90] sm:$0xff]
  %v65 = vld [vmem:[%s1 + $0x98] sm:$0xff]
  %v66 = vld [vmem:[%s1 + $0xa0] sm:$0xff]
  %v67 = vld [vmem:[%s1 + $0xa8] sm:$0xff]
  %v68 = vld [vmem:[%s1 + $0xb0] sm:$0xff]
  %v69 = vld [vmem:[%s1 + $0xb8] sm:$0xff]
  %v70 = vld [vmem:[%s1 + $0xc0] sm:$0xff]
  %v71 = vld [vmem:[%s1 + $0xc8] sm:$0xff]
  %v72 = vld [vmem:[%s1 + $0xd0] sm:$0xff]
  %v73 = vld [vmem:[%s1 + $0xd8] sm:$0xff]
  %v74 = vld [vmem:[%s1 + $0xe0] sm:$0xff]
  %v75 = vld [vmem:[%s1 + $0xe8] sm:$0xff]
  %v76 = vld [vmem:[%s1 + $0xf0] sm:$0xff]
  %v77 = vld [vmem:[%s1 + $0xf8] sm:$0xff]
  %v78 = vld [vmem:[%s1 + $0x100] sm:$0xff]
  %v79 = vld [vmem:[%s1 + $0x108] sm:$0xff]
  %v80 = vld [vmem:[%s1 + $0x110] sm:$0xff]
  %v81 = vld [vmem:[%s1 + $0x118] sm:$0xff]
  %v82 = vld [vmem:[%s1 + $0x120] sm:$0xff]
  %v83 = vld [vmem:[%s1 + $0x128] sm:$0xff]
  %v84 = vld [vmem:[%s1 + $0x130] sm:$0xff]
  %v85 = vld [vmem:[%s1 + $0x138] sm:$0xff]
  %v86 = vld [vmem:[%s1 + $0x140] sm:$0xff]
  %v87 = vld [vmem:[%s1 + $0x148] sm:$0xff]
  %v88 = vld [vmem:[%s1 + $0x150] sm:$0xff]
  %v89 = vld [vmem:[%s1 + $0x158] sm:$0xff]
  %v90 = vld [vmem:[%s1 + $0x160] sm:$0xff]
  %v91 = vld [vmem:[%s1 + $0x168] sm:$0xff]
  %v92 = vld [vmem:[%s1 + $0x170] sm:$0xff]
  %v93 = vld [vmem:[%s1 + $0x178] sm:$0xff]
  %v94 = vld [vmem:[%s1 + $0x180] sm:$0xff]
  %v95 = vld [vmem:[%s1 + $0x188] sm:$0xff]
  %v96 = vld [vmem:[%s1 + $0x190] sm:$0xff]
  %v97 = vld [vmem:[%s1 + $0x198] sm:$0xff]
  %v98 = vld [vmem:[%s1 + $0x1a0] sm:$0xff]
  %v99 = vld [vmem:[%s1 + $0x1a8] sm:$0xff]
  %v100 = vld [vmem:[%s1 + $0x1b0] sm:$0xff]
  %v101 = vld [vmem:[%s1 + $0x1b8] sm:$0xff]
  %v102 = vld [vmem:[%s1 + $0x1c0] sm:$0xff]
  %v103 = vld [vmem:[%s1 + $0x1c8] sm:$0xff]
  %v104 = vld [vmem:[%s1 + $0x1d0] sm:$0xff]
  %v105 = vld [vmem:[%s1 + $0x1d8] sm:$0xff]
  %v106 = vld [vmem:[%s1 + $0x1e0] sm:$0xff]
  %v107 = vld [vmem:[%s1 + $0x1e8] sm:$0xff]
  %v108 = vld [vmem:[%s1 + $0x1f0] sm:$0xff]
  %v109 = vld [vmem:[%s1 + $0x1f8] sm:$0xff]
  %v110 = vld [vmem:[%s2] sm:$0x1]
  %v112 = vlaneseq
  %v113 = vshrl.u32 %v112, 7
  %v114 = vsub.s32 0, %v113
  %v115 = vrot.slane %v110, %v114
  %117 = vmatprep.subr.mxu0 0.0
  %118 = vmatpush1.msra.mxu0 %v46
  %119 = vmatprep.subr.mxu0 0.0
  %120 = vmatpush1.msra.mxu0 %v47
  %121 = vmatprep.subr.mxu0 0.0
  %122 = vmatpush1.msra.mxu0 %v48
  %123 = vmatprep.subr.mxu0 0.0
  %124 = vmatpush1.msra.mxu0 %v49
  %125 = vmatprep.subr.mxu0 0.0
  %126 = vmatpush1.msra.mxu0 %v50
  %127 = vmatprep.subr.mxu0 0.0
  %128 = vmatpush1.msra.mxu0 %v51
  %129 = vmatprep.subr.mxu0 0.0
  %130 = vmatpush1.msra.mxu0 %v52
  %131 = vmatprep.subr.mxu0 0.0
  %132 = vmatpush1.msra.mxu0 %v53
  %133 = vmatprep.subr.mxu0 0.0
  %134 = vmatpush1.msra.mxu0 %v54
  %135 = vmatprep.subr.mxu0 0.0
  %136 = vmatpush1.msra.mxu0 %v55
  %137 = vmatprep.subr.mxu0 0.0
  %138 = vmatpush1.msra.mxu0 %v56
  %139 = vmatprep.subr.mxu0 0.0
  %140 = vmatpush1.msra.mxu0 %v57
  %141 = vmatprep.subr.mxu0 0.0
  %142 = vmatpush1.msra.mxu0 %v58
  %143 = vmatprep.subr.mxu0 0.0
  %144 = vmatpush1.msra.mxu0 %v59
  %145 = vmatprep.subr.mxu0 0.0
  %146 = vmatpush1.msra.mxu0 %v60
  %147 = vmatprep.subr.mxu0 0.0
  %148 = vmatpush1.msra.mxu0 %v61
  %149 = vmatprep.subr.mxu0 0.0
  %150 = vmatpush1.msra.mxu0 %v62
  %151 = vmatprep.subr.mxu0 0.0
  %152 = vmatpush1.msra.mxu0 %v63
  %153 = vmatprep.subr.mxu0 0.0
  %154 = vmatpush1.msra.mxu0 %v64
  %155 = vmatprep.subr.mxu0 0.0
  %156 = vmatpush1.msra.mxu0 %v65
  %157 = vmatprep.subr.mxu0 0.0
  %158 = vmatpush1.msra.mxu0 %v66
  %159 = vmatprep.subr.mxu0 0.0
  %160 = vmatpush1.msra.mxu0 %v67
  %161 = vmatprep.subr.mxu0 0.0
  %162 = vmatpush1.msra.mxu0 %v68
  %163 = vmatprep.subr.mxu0 0.0
  %164 = vmatpush1.msra.mxu0 %v69
  %165 = vmatprep.subr.mxu0 0.0
  %166 = vmatpush1.msra.mxu0 %v70
  %167 = vmatprep.subr.mxu0 0.0
  %168 = vmatpush1.msra.mxu0 %v71
  %169 = vmatprep.subr.mxu0 0.0
  %170 = vmatpush1.msra.mxu0 %v72
  %171 = vmatprep.subr.mxu0 0.0
  %172 = vmatpush1.msra.mxu0 %v73
  %173 = vmatprep.subr.mxu0 0.0
  %174 = vmatpush1.msra.mxu0 %v74
  %175 = vmatprep.subr.mxu0 0.0
  %176 = vmatpush1.msra.mxu0 %v75
  %177 = vmatprep.subr.mxu0 0.0
  %178 = vmatpush1.msra.mxu0 %v76
  %179 = vmatprep.subr.mxu0 0.0
  %180 = vmatpush1.msra.mxu0 %v77
  %181 = vmatprep.mubr.f32.mxu0 %v15
  %182 = vmatmul.mubr.f32.gmra.mrb[0].mxu0 %v14
  %v183 = vpop.f32.mrb[0].mxu0
  %v184 = vadd.f32 %v115, %v183
  %v185 = vpop.f32.mrb[0].mxu0
  %186 = vmatprep.mubr.f32.mxu0 %v19
  %187 = vmatmul.mubr.f32.gmra.mrb[0].mxu0 %v18
  %v188 = vpop.f32.mrb[0].mxu0
  %v189 = vadd.f32 %v115, %v188
  %v190 = vpop.f32.mrb[0].mxu0
  %191 = vmatprep.mubr.f32.mxu0 %v23
  %192 = vmatmul.mubr.f32.gmra.mrb[0].mxu0 %v22
  %v193 = vpop.f32.mrb[0].mxu0
  %v194 = vadd.f32 %v115, %v193
  %v195 = vpop.f32.mrb[0].mxu0
  %196 = vmatprep.mubr.f32.mxu0 %v27
  %197 = vmatmul.mubr.f32.gmra.mrb[0].mxu0 %v26
  %v198 = vpop.f32.mrb[0].mxu0
  %v199 = vadd.f32 %v115, %v198
  %v200 = vpop.f32.mrb[0].mxu0
  %201 = vmatprep.mubr.f32.mxu0 %v31
  %202 = vmatmul.mubr.f32.gmra.mrb[0].mxu0 %v30
  %v203 = vpop.f32.mrb[0].mxu0
  %v204 = vadd.f32 %v115, %v203
  %v205 = vpop.f32.mrb[0].mxu0
  %206 = vmatprep.mubr.f32.mxu0 %v35
  %207 = vmatmul.mubr.f32.gmra.mrb[0].mxu0 %v34
  %v208 = vpop.f32.mrb[0].mxu0
  %v209 = vadd.f32 %v115, %v208
  %v210 = vpop.f32.mrb[0].mxu0
  %211 = vmatprep.mubr.f32.mxu0 %v39
  %212 = vmatmul.mubr.f32.gmra.mrb[0].mxu0 %v38
  %v213 = vpop.f32.mrb[0].mxu0
  %v214 = vadd.f32 %v115, %v213
  %v215 = vpop.f32.mrb[0].mxu0
  %216 = vmatprep.mubr.f32.mxu0 %v43
  %217 = vmatmul.mubr.f32.gmra.mrb[0].mxu0 %v42
  %v218 = vpop.f32.mrb[0].mxu0
  %v219 = vadd.f32 %v115, %v218
  %v220 = vpop.f32.mrb[0].mxu0
  %221 = vdwg.mxu0
  %222 = vmatprep.subr.mxu0 0.0
  %223 = vmatpush1.msra.mxu0 %v78
  %224 = vmatprep.subr.mxu0 0.0
  %225 = vmatpush1.msra.mxu0 %v79
  %226 = vmatprep.subr.mxu0 0.0
  %227 = vmatpush1.msra.mxu0 %v80
  %228 = vmatprep.subr.mxu0 0.0
  %229 = vmatpush1.msra.mxu0 %v81
  %230 = vmatprep.subr.mxu0 0.0
  %231 = vmatpush1.msra.mxu0 %v82
  %232 = vmatprep.subr.mxu0 0.0
  %233 = vmatpush1.msra.mxu0 %v83
  %234 = vmatprep.subr.mxu0 0.0
  %235 = vmatpush1.msra.mxu0 %v84
  %236 = vmatprep.subr.mxu0 0.0
  %237 = vmatpush1.msra.mxu0 %v85
  %238 = vmatprep.subr.mxu0 0.0
  %239 = vmatpush1.msra.mxu0 %v86
  %240 = vmatprep.subr.mxu0 0.0
  %241 = vmatpush1.msra.mxu0 %v87
  %242 = vmatprep.subr.mxu0 0.0
  %243 = vmatpush1.msra.mxu0 %v88
  %244 = vmatprep.subr.mxu0 0.0
  %245 = vmatpush1.msra.mxu0 %v89
  %246 = vmatprep.subr.mxu0 0.0
  %247 = vmatpush1.msra.mxu0 %v90
  %248 = vmatprep.subr.mxu0 0.0
  %249 = vmatpush1.msra.mxu0 %v91
  %250 = vmatprep.subr.mxu0 0.0
  %251 = vmatpush1.msra.mxu0 %v92
  %252 = vmatprep.subr.mxu0 0.0
  %253 = vmatpush1.msra.mxu0 %v93
  %254 = vmatprep.subr.mxu0 0.0
  %255 = vmatpush1.msra.mxu0 %v94
  %256 = vmatprep.subr.mxu0 0.0
  %257 = vmatpush1.msra.mxu0 %v95
  %258 = vmatprep.subr.mxu0 0.0
  %259 = vmatpush1.msra.mxu0 %v96
  %260 = vmatprep.subr.mxu0 0.0
  %261 = vmatpush1.msra.mxu0 %v97
  %262 = vmatprep.subr.mxu0 0.0
  %263 = vmatpush1.msra.mxu0 %v98
  %264 = vmatprep.subr.mxu0 0.0
  %265 = vmatpush1.msra.mxu0 %v99
  %266 = vmatprep.subr.mxu0 0.0
  %267 = vmatpush1.msra.mxu0 %v100
  %268 = vmatprep.subr.mxu0 0.0
  %269 = vmatpush1.msra.mxu0 %v101
  %270 = vmatprep.subr.mxu0 0.0
  %271 = vmatpush1.msra.mxu0 %v102
  %272 = vmatprep.subr.mxu0 0.0
  %273 = vmatpush1.msra.mxu0 %v103
  %274 = vmatprep.subr.mxu0 0.0
  %275 = vmatpush1.msra.mxu0 %v104
  %276 = vmatprep.subr.mxu0 0.0
  %277 = vmatpush1.msra.mxu0 %v105
  %278 = vmatprep.subr.mxu0 0.0
  %279 = vmatpush1.msra.mxu0 %v106
  %280 = vmatprep.subr.mxu0 0.0
  %281 = vmatpush1.msra.mxu0 %v107
  %282 = vmatprep.subr.mxu0 0.0
  %283 = vmatpush1.msra.mxu0 %v108
  %284 = vmatprep.subr.mxu0 0.0
  %285 = vmatpush1.msra.mxu0 %v109
  %286 = vmatprep.mubr.f32.mxu0 %v17
  %287 = vmatmul.mubr.f32.gmra.mrb[0].mxu0 %v16
  %v288 = vpop.f32.mrb[0].mxu0
  %v289 = vadd.f32 %v184, %v288
  %v290 = vpop.f32.mrb[0].mxu0
  %291 = vmatprep.mubr.f32.mxu0 %v21
  %292 = vmatmul.mubr.f32.gmra.mrb[0].mxu0 %v20
  %v293 = vpop.f32.mrb[0].mxu0
  %v294 = vadd.f32 %v189, %v293
  %v295 = vpop.f32.mrb[0].mxu0
  %296 = vmatprep.mubr.f32.mxu0 %v25
  %297 = vmatmul.mubr.f32.gmra.mrb[0].mxu0 %v24
  %v298 = vpop.f32.mrb[0].mxu0
  %v299 = vadd.f32 %v194, %v298
  %v300 = vpop.f32.mrb[0].mxu0
  %301 = vmatprep.mubr.f32.mxu0 %v29
  %302 = vmatmul.mubr.f32.gmra.mrb[0].mxu0 %v28
  %v303 = vpop.f32.mrb[0].mxu0
  %v304 = vadd.f32 %v199, %v303
  %v305 = vpop.f32.mrb[0].mxu0
  %306 = vmatprep.mubr.f32.mxu0 %v33
  %307 = vmatmul.mubr.f32.gmra.mrb[0].mxu0 %v32
  %v308 = vpop.f32.mrb[0].mxu0
  %v309 = vadd.f32 %v204, %v308
  %v310 = vpop.f32.mrb[0].mxu0
  %311 = vmatprep.mubr.f32.mxu0 %v37
  %312 = vmatmul.mubr.f32.gmra.mrb[0].mxu0 %v36
  %v313 = vpop.f32.mrb[0].mxu0
  %v314 = vadd.f32 %v209, %v313
  %v315 = vpop.f32.mrb[0].mxu0
  %316 = vmatprep.mubr.f32.mxu0 %v41
  %317 = vmatmul.mubr.f32.gmra.mrb[0].mxu0 %v40
  %v318 = vpop.f32.mrb[0].mxu0
  %v319 = vadd.f32 %v214, %v318
  %v320 = vpop.f32.mrb[0].mxu0
  %321 = vmatprep.mubr.f32.mxu0 %v45
  %322 = vmatmul.mubr.f32.gmra.mrb[0].mxu0 %v44
  %v323 = vpop.f32.mrb[0].mxu0
  %v324 = vadd.f32 %v219, %v323
  %v325 = vpop.f32.mrb[0].mxu0
  %326 = vdwg.mxu0
  %vm327 = vcmask 261120
  %328 = vst.msk [vmem:[%s3] sm:$0xff] %vm327, %v289
  %329 = vst.msk [vmem:[%s3 + $0x8] sm:$0xff] %vm327, %v294
  %330 = vst.msk [vmem:[%s3 + $0x10] sm:$0xff] %vm327, %v299
  %331 = vst.msk [vmem:[%s3 + $0x18] sm:$0xff] %vm327, %v304
  %332 = vst.msk [vmem:[%s3 + $0x20] sm:$0xff] %vm327, %v309
  %333 = vst.msk [vmem:[%s3 + $0x28] sm:$0xff] %vm327, %v314
  %334 = vst.msk [vmem:[%s3 + $0x30] sm:$0xff] %vm327, %v319
  %335 = vst.msk [vmem:[%s3 + $0x38] sm:$0xff] %vm327, %v324
  // Predicated region
  $region14: #{encoder_forward.7} parent=0 // pred_check
    _
  $region15: #{encoder_forward.7} parent=0 // pred_check_branch
    %337 = sbr.rel (0) target = $region17
  $region16: #{encoder_forward.7} parent=0 // pred_region
    _
  $region17: #{encoder_forward.7} parent=0 // pred_fallthru
    _
  // Predicated region
  $region18: #{encoder_forward.7} parent=0 // pred_check
    _
  $region19: #{encoder_forward.7} parent=0 // pred_check_branch
    %339 = sbr.rel (0) target = $region21
  $region20: #{encoder_forward.7} parent=0 // pred_region
    _
  $region21: #{encoder_forward.7} parent=0 // pred_fallthru
    _

// kernel: encoder_forward.8
$region0: #{encoder_forward.8}
  #allocation0 [shape = 'u32[]', space=smem, size = 0x4, offset = 0x4, fixed_abs, tag = 'smem constant byte address 0x4 - core index']
  #allocation1 [shape = 'u32[144,128]{1,0:T(1,128)}', space=vmem, size = 0x12000, scoped, tag = 'internal scratch']
  %s0 = inlined_call_operand.vmem [shape: f32[64,288], index: 0, kind: input, shape index: {}]
  %s1 = inlined_call_operand.vmem [shape: f32[288,32], index: 1, kind: input, shape index: {}]
  %s2 = inlined_call_operand.vmem [shape: f32[1,32], index: 2, kind: input, shape index: {}]
  %s3 = inlined_call_operand.vmem [shape: f32[64,32], index: 3, kind: output, shape index: {}]
  %s4 = sld [smem:[#allocation0]]
  $region22: #{encoder_forward.8} parent=0
    _
  %s6 = ssub.s32 1, %s4
  %s7 = scalar_select 0, %s6, %s4
  // Predicated region
  $region2: #{encoder_forward.8} parent=0 // pred_check
    _
  $region3: #{encoder_forward.8} parent=0 // pred_check_branch
    %9 = sbr.rel (0) target = $region5
  $region4: #{encoder_forward.8} parent=0 // pred_region
    _
  $region5: #{encoder_forward.8} parent=0 // pred_fallthru
    _
  // Predicated region
  $region6: #{encoder_forward.8} parent=0 // pred_check
    _
  $region7: #{encoder_forward.8} parent=0 // pred_check_branch
    %11 = sbr.rel (0) target = $region9
  $region8: #{encoder_forward.8} parent=0 // pred_region
    _
  $region9: #{encoder_forward.8} parent=0 // pred_fallthru
    _
  // Predicated region
  $region10: #{encoder_forward.8} parent=0 // pred_check
    _
  $region11: #{encoder_forward.8} parent=0 // pred_check_branch
    %13 = sbr.rel (0) target = $region13
  $region12: #{encoder_forward.8} parent=0 // pred_region
    _
  $region13: #{encoder_forward.8} parent=0 // pred_fallthru
    _
  %v14 = vld [vmem:[%s0] sm:$0xff]
  %v15 = vld [vmem:[%s0 + $0x8] sm:$0xff]
  %v16 = vld [vmem:[%s0 + $0x10] sm:$0xff]
  %v17 = vld [vmem:[%s0 + $0x18] sm:$0xff]
  %v18 = vld [vmem:[%s0 + $0x20] sm:$0xff]
  %v19 = vld [vmem:[%s0 + $0x28] sm:$0xff]
  %v20 = vld [vmem:[%s0 + $0x30] sm:$0xff]
  %v21 = vld [vmem:[%s0 + $0x38] sm:$0xff]
  %v22 = vld [vmem:[%s0 + $0x40] sm:$0xff]
  %v23 = vld [vmem:[%s0 + $0x48] sm:$0xff]
  %v24 = vld [vmem:[%s0 + $0x50] sm:$0xff]
  %v25 = vld [vmem:[%s0 + $0x58] sm:$0xff]
  %v26 = vld [vmem:[%s0 + $0x60] sm:$0xff]
  %v27 = vld [vmem:[%s0 + $0x68] sm:$0xff]
  %v28 = vld [vmem:[%s0 + $0x70] sm:$0xff]
  %v29 = vld [vmem:[%s0 + $0x78] sm:$0xff]
  %v30 = vld [vmem:[%s0 + $0x80] sm:$0xff]
  %v31 = vld [vmem:[%s0 + $0x88] sm:$0xff]
  %v32 = vld [vmem:[%s0 + $0x90] sm:$0xff]
  %v33 = vld [vmem:[%s0 + $0x98] sm:$0xff]
  %v34 = vld [vmem:[%s0 + $0xa0] sm:$0xff]
  %v35 = vld [vmem:[%s0 + $0xa8] sm:$0xff]
  %v36 = vld [vmem:[%s0 + $0xb0] sm:$0xff]
  %v37 = vld [vmem:[%s0 + $0xb8] sm:$0xff]
  %v38 = vld [vmem:[%s1] sm:$0xff]
  %v39 = vld [vmem:[%s1 + $0x8] sm:$0xff]
  %v40 = vld [vmem:[%s1 + $0x10] sm:$0xff]
  %v41 = vld [vmem:[%s1 + $0x18] sm:$0xff]
  %v42 = vld [vmem:[%s1 + $0x20] sm:$0xff]
  %v43 = vld [vmem:[%s1 + $0x28] sm:$0xff]
  %v44 = vld [vmem:[%s1 + $0x30] sm:$0xff]
  %v45 = vld [vmem:[%s1 + $0x38] sm:$0xff]
  %v46 = vld [vmem:[%s1 + $0x40] sm:$0xff]
  %v47 = vld [vmem:[%s1 + $0x48] sm:$0xff]
  %v48 = vld [vmem:[%s1 + $0x50] sm:$0xff]
  %v49 = vld [vmem:[%s1 + $0x58] sm:$0xff]
  %v50 = vld [vmem:[%s1 + $0x60] sm:$0xff]
  %v51 = vld [vmem:[%s1 + $0x68] sm:$0xff]
  %v52 = vld [vmem:[%s1 + $0x70] sm:$0xff]
  %v53 = vld [vmem:[%s1 + $0x78] sm:$0xff]
  %v54 = vld [vmem:[%s1 + $0x80] sm:$0xff]
  %v55 = vld [vmem:[%s1 + $0x88] sm:$0xff]
  %v56 = vld [vmem:[%s1 + $0x90] sm:$0xff]
  %v57 = vld [vmem:[%s1 + $0x98] sm:$0xff]
  %v58 = vld [vmem:[%s1 + $0xa0] sm:$0xff]
  %v59 = vld [vmem:[%s1 + $0xa8] sm:$0xff]
  %v60 = vld [vmem:[%s1 + $0xb0] sm:$0xff]
  %v61 = vld [vmem:[%s1 + $0xb8] sm:$0xff]
  %v62 = vld [vmem:[%s1 + $0xc0] sm:$0xff]
  %v63 = vld [vmem:[%s1 + $0xc8] sm:$0xff]
  %v64 = vld [vmem:[%s1 + $0xd0] sm:$0xff]
  %v65 = vld [vmem:[%s1 + $0xd8] sm:$0xff]
  %v66 = vld [vmem:[%s1 + $0xe0] sm:$0xff]
  %v67 = vld [vmem:[%s1 + $0xe8] sm:$0xff]
  %v68 = vld [vmem:[%s1 + $0xf0] sm:$0xff]
  %v69 = vld [vmem:[%s1 + $0xf8] sm:$0xff]
  %v70 = vld [vmem:[%s1 + $0x100] sm:$0xff]
  %v71 = vld [vmem:[%s1 + $0x108] sm:$0xff]
  %v72 = vld [vmem:[%s1 + $0x110] sm:$0xff]
  %v73 = vld [vmem:[%s1 + $0x118] sm:$0xff]
  %v74 = vld [vmem:[%s2] sm:$0x1]
  %v76 = vlaneseq
  %v77 = vshrl.u32 %v76, 7
  %v78 = vsub.s32 0, %v77
  %v79 = vrot.slane %v74, %v78
  %vm81 = vcmask 261120
  %v83 = vsel %vm81, %v16, 0
  %v86 = vsel %vm81, %v19, 0
  %v89 = vsel %vm81, %v22, 0
  %v92 = vsel %vm81, %v25, 0
  %v95 = vsel %vm81, %v28, 0
  %v98 = vsel %vm81, %v31, 0
  %v101 = vsel %vm81, %v34, 0
  %v104 = vsel %vm81, %v37, 0
  %106 = vmatprep.subr.mxu0 0.0
  %107 = vmatpush1.msra.mxu0 %v38
  %108 = vmatprep.subr.mxu0 0.0
  %109 = vmatpush1.msra.mxu0 %v39
  %110 = vmatprep.subr.mxu0 0.0
  %111 = vmatpush1.msra.mxu0 %v40
  %112 = vmatprep.subr.mxu0 0.0
  %113 = vmatpush1.msra.mxu0 %v41
  %114 = vmatprep.subr.mxu0 0.0
  %115 = vmatpush1.msra.mxu0 %v42
  %116 = vmatprep.subr.mxu0 0.0
  %117 = vmatpush1.msra.mxu0 %v43
  %118 = vmatprep.subr.mxu0 0.0
  %119 = vmatpush1.msra.mxu0 %v44
  %120 = vmatprep.subr.mxu0 0.0
  %121 = vmatpush1.msra.mxu0 %v45
  %122 = vmatprep.subr.mxu0 0.0
  %123 = vmatpush1.msra.mxu0 %v46
  %124 = vmatprep.subr.mxu0 0.0
  %125 = vmatpush1.msra.mxu0 %v47
  %126 = vmatprep.subr.mxu0 0.0
  %127 = vmatpush1.msra.mxu0 %v48
  %128 = vmatprep.subr.mxu0 0.0
  %129 = vmatpush1.msra.mxu0 %v49
  %130 = vmatprep.subr.mxu0 0.0
  %131 = vmatpush1.msra.mxu0 %v50
  %132 = vmatprep.subr.mxu0 0.0
  %133 = vmatpush1.msra.mxu0 %v51
  %134 = vmatprep.subr.mxu0 0.0
  %135 = vmatpush1.msra.mxu0 %v52
  %136 = vmatprep.subr.mxu0 0.0
  %137 = vmatpush1.msra.mxu0 %v53
  %138 = vmatprep.subr.mxu0 0.0
  %139 = vmatpush1.msra.mxu0 %v54
  %140 = vmatprep.subr.mxu0 0.0
  %141 = vmatpush1.msra.mxu0 %v55
  %142 = vmatprep.subr.mxu0 0.0
  %143 = vmatpush1.msra.mxu0 %v56
  %144 = vmatprep.subr.mxu0 0.0
  %145 = vmatpush1.msra.mxu0 %v57
  %146 = vmatprep.subr.mxu0 0.0
  %147 = vmatpush1.msra.mxu0 %v58
  %148 = vmatprep.subr.mxu0 0.0
  %149 = vmatpush1.msra.mxu0 %v59
  %150 = vmatprep.subr.mxu0 0.0
  %151 = vmatpush1.msra.mxu0 %v60
  %152 = vmatprep.subr.mxu0 0.0
  %153 = vmatpush1.msra.mxu0 %v61
  %154 = vmatprep.subr.mxu0 0.0
  %155 = vmatpush1.msra.mxu0 %v62
  %156 = vmatprep.subr.mxu0 0.0
  %157 = vmatpush1.msra.mxu0 %v63
  %158 = vmatprep.subr.mxu0 0.0
  %159 = vmatpush1.msra.mxu0 %v64
  %160 = vmatprep.subr.mxu0 0.0
  %161 = vmatpush1.msra.mxu0 %v65
  %162 = vmatprep.subr.mxu0 0.0
  %163 = vmatpush1.msra.mxu0 %v66
  %164 = vmatprep.subr.mxu0 0.0
  %165 = vmatpush1.msra.mxu0 %v67
  %166 = vmatprep.subr.mxu0 0.0
  %167 = vmatpush1.msra.mxu0 %v68
  %168 = vmatprep.subr.mxu0 0.0
  %169 = vmatpush1.msra.mxu0 %v69
  %170 = vmatprep.mubr.f32.mxu0 %v15
  %171 = vmatmul.mubr.f32.gmra.mrb[0].mxu0 %v14
  %v172 = vpop.f32.mrb[0].mxu0
  %v173 = vadd.f32 %v79, %v172
  %v174 = vpop.f32.mrb[0].mxu0
  %175 = vmatprep.mubr.f32.mxu0 %v18
  %176 = vmatmul.mubr.f32.gmra.mrb[0].mxu0 %v17
  %v177 = vpop.f32.mrb[0].mxu0
  %v178 = vadd.f32 %v79, %v177
  %v179 = vpop.f32.mrb[0].mxu0
  %180 = vmatprep.mubr.f32.mxu0 %v21
  %181 = vmatmul.mubr.f32.gmra.mrb[0].mxu0 %v20
  %v182 = vpop.f32.mrb[0].mxu0
  %v183 = vadd.f32 %v79, %v182
  %v184 = vpop.f32.mrb[0].mxu0
  %185 = vmatprep.mubr.f32.mxu0 %v24
  %186 = vmatmul.mubr.f32.gmra.mrb[0].mxu0 %v23
  %v187 = vpop.f32.mrb[0].mxu0
  %v188 = vadd.f32 %v79, %v187
  %v189 = vpop.f32.mrb[0].mxu0
  %190 = vmatprep.mubr.f32.mxu0 %v27
  %191 = vmatmul.mubr.f32.gmra.mrb[0].mxu0 %v26
  %v192 = vpop.f32.mrb[0].mxu0
  %v193 = vadd.f32 %v79, %v192
  %v194 = vpop.f32.mrb[0].mxu0
  %195 = vmatprep.mubr.f32.mxu0 %v30
  %196 = vmatmul.mubr.f32.gmra.mrb[0].mxu0 %v29
  %v197 = vpop.f32.mrb[0].mxu0
  %v198 = vadd.f32 %v79, %v197
  %v199 = vpop.f32.mrb[0].mxu0
  %200 = vmatprep.mubr.f32.mxu0 %v33
  %201 = vmatmul.mubr.f32.gmra.mrb[0].mxu0 %v32
  %v202 = vpop.f32.mrb[0].mxu0
  %v203 = vadd.f32 %v79, %v202
  %v204 = vpop.f32.mrb[0].mxu0
  %205 = vmatprep.mubr.f32.mxu0 %v36
  %206 = vmatmul.mubr.f32.gmra.mrb[0].mxu0 %v35
  %v207 = vpop.f32.mrb[0].mxu0
  %v208 = vadd.f32 %v79, %v207
  %v209 = vpop.f32.mrb[0].mxu0
  %210 = vdwg.mxu0
  %211 = vmatprep.subr.mxu0 0.0
  %212 = vmatpush1.msra.mxu0 %v70
  %213 = vmatprep.subr.mxu0 0.0
  %214 = vmatpush1.msra.mxu0 %v71
  %215 = vmatprep.subr.mxu0 0.0
  %216 = vmatpush1.msra.mxu0 %v72
  %217 = vmatprep.subr.mxu0 0.0
  %218 = vmatpush1.msra.mxu0 %v73
  %219 = vmatprep.subr.mxu0 0.0
  %220 = vmatpush1.msra.mxu0 0.0
  %221 = vmatprep.subr.mxu0 0.0
  %222 = vmatpush1.msra.mxu0 0.0
  %223 = vmatprep.subr.mxu0 0.0
  %224 = vmatpush1.msra.mxu0 0.0
  %225 = vmatprep.subr.mxu0 0.0
  %226 = vmatpush1.msra.mxu0 0.0
  %227 = vmatprep.subr.mxu0 0.0
  %228 = vmatpush1.msra.mxu0 0.0
  %229 = vmatprep.subr.mxu0 0.0
  %230 = vmatpush1.msra.mxu0 0.0
  %231 = vmatprep.subr.mxu0 0.0
  %232 = vmatpush1.msra.mxu0 0.0
  %233 = vmatprep.subr.mxu0 0.0
  %234 = vmatpush1.msra.mxu0 0.0
  %235 = vmatprep.subr.mxu0 0.0
  %236 = vmatpush1.msra.mxu0 0.0
  %237 = vmatprep.subr.mxu0 0.0
  %238 = vmatpush1.msra.mxu0 0.0
  %239 = vmatprep.subr.mxu0 0.0
  %240 = vmatpush1.msra.mxu0 0.0
  %241 = vmatprep.subr.mxu0 0.0
  %242 = vmatpush1.msra.mxu0 0.0
  %243 = vmatprep.subr.mxu0 0.0
  %244 = vmatpush1.msra.mxu0 0.0
  %245 = vmatprep.subr.mxu0 0.0
  %246 = vmatpush1.msra.mxu0 0.0
  %247 = vmatprep.subr.mxu0 0.0
  %248 = vmatpush1.msra.mxu0 0.0
  %249 = vmatprep.subr.mxu0 0.0
  %250 = vmatpush1.msra.mxu0 0.0
  %251 = vmatprep.subr.mxu0 0.0
  %252 = vmatpush1.msra.mxu0 0.0
  %253 = vmatprep.subr.mxu0 0.0
  %254 = vmatpush1.msra.mxu0 0.0
  %255 = vmatprep.subr.mxu0 0.0
  %256 = vmatpush1.msra.mxu0 0.0
  %257 = vmatprep.subr.mxu0 0.0
  %258 = vmatpush1.msra.mxu0 0.0
  %259 = vmatprep.subr.mxu0 0.0
  %260 = vmatpush1.msra.mxu0 0.0
  %261 = vmatprep.subr.mxu0 0.0
  %262 = vmatpush1.msra.mxu0 0.0
  %263 = vmatprep.subr.mxu0 0.0
  %264 = vmatpush1.msra.mxu0 0.0
  %265 = vmatprep.subr.mxu0 0.0
  %266 = vmatpush1.msra.mxu0 0.0
  %267 = vmatprep.subr.mxu0 0.0
  %268 = vmatpush1.msra.mxu0 0.0
  %269 = vmatprep.subr.mxu0 0.0
  %270 = vmatpush1.msra.mxu0 0.0
  %271 = vmatprep.subr.mxu0 0.0
  %272 = vmatpush1.msra.mxu0 0.0
  %273 = vmatprep.subr.mxu0 0.0
  %274 = vmatpush1.msra.mxu0 0.0
  %275 = vmatprep.mubr.f32.mxu0 0.0
  %276 = vmatmul.mubr.f32.gmra.mrb[0].mxu0 %v83
  %v277 = vpop.f32.mrb[0].mxu0
  %v278 = vadd.f32 %v173, %v277
  %v279 = vpop.f32.mrb[0].mxu0
  %280 = vmatprep.mubr.f32.mxu0 0.0
  %281 = vmatmul.mubr.f32.gmra.mrb[0].mxu0 %v86
  %v282 = vpop.f32.mrb[0].mxu0
  %v283 = vadd.f32 %v178, %v282
  %v284 = vpop.f32.mrb[0].mxu0
  %285 = vmatprep.mubr.f32.mxu0 0.0
  %286 = vmatmul.mubr.f32.gmra.mrb[0].mxu0 %v89
  %v287 = vpop.f32.mrb[0].mxu0
  %v288 = vadd.f32 %v183, %v287
  %v289 = vpop.f32.mrb[0].mxu0
  %290 = vmatprep.mubr.f32.mxu0 0.0
  %291 = vmatmul.mubr.f32.gmra.mrb[0].mxu0 %v92
  %v292 = vpop.f32.mrb[0].mxu0
  %v293 = vadd.f32 %v188, %v292
  %v294 = vpop.f32.mrb[0].mxu0
  %295 = vmatprep.mubr.f32.mxu0 0.0
  %296 = vmatmul.mubr.f32.gmra.mrb[0].mxu0 %v95
  %v297 = vpop.f32.mrb[0].mxu0
  %v298 = vadd.f32 %v193, %v297
  %v299 = vpop.f32.mrb[0].mxu0
  %300 = vmatprep.mubr.f32.mxu0 0.0
  %301 = vmatmul.mubr.f32.gmra.mrb[0].mxu0 %v98
  %v302 = vpop.f32.mrb[0].mxu0
  %v303 = vadd.f32 %v198, %v302
  %v304 = vpop.f32.mrb[0].mxu0
  %305 = vmatprep.mubr.f32.mxu0 0.0
  %306 = vmatmul.mubr.f32.gmra.mrb[0].mxu0 %v101
  %v307 = vpop.f32.mrb[0].mxu0
  %v308 = vadd.f32 %v203, %v307
  %v309 = vpop.f32.mrb[0].mxu0
  %310 = vmatprep.mubr.f32.mxu0 0.0
  %311 = vmatmul.mubr.f32.gmra.mrb[0].mxu0 %v104
  %v312 = vpop.f32.mrb[0].mxu0
  %v313 = vadd.f32 %v208, %v312
  %v314 = vpop.f32.mrb[0].mxu0
  %315 = vdwg.mxu0
  %v316 = vmax.f32 %v278, 0.0
  %v317 = vmax.f32 %v283, 0.0
  %v318 = vmax.f32 %v288, 0.0
  %v319 = vmax.f32 %v293, 0.0
  %v320 = vmax.f32 %v298, 0.0
  %v321 = vmax.f32 %v303, 0.0
  %v322 = vmax.f32 %v308, 0.0
  %v323 = vmax.f32 %v313, 0.0
  %324 = vst.msk [vmem:[%s3] sm:$0xff] %vm81, %v316
  %325 = vst.msk [vmem:[%s3 + $0x8] sm:$0xff] %vm81, %v317
  %326 = vst.msk [vmem:[%s3 + $0x10] sm:$0xff] %vm81, %v318
  %327 = vst.msk [vmem:[%s3 + $0x18] sm:$0xff] %vm81, %v319
  %328 = vst.msk [vmem:[%s3 + $0x20] sm:$0xff] %vm81, %v320
  %329 = vst.msk [vmem:[%s3 + $0x28] sm:$0xff] %vm81, %v321
  %330 = vst.msk [vmem:[%s3 + $0x30] sm:$0xff] %vm81, %v322
  %331 = vst.msk [vmem:[%s3 + $0x38] sm:$0xff] %vm81, %v323
  // Predicated region
  $region14: #{encoder_forward.8} parent=0 // pred_check
    _
  $region15: #{encoder_forward.8} parent=0 // pred_check_branch
    %333 = sbr.rel (0) target = $region17
  $region16: #{encoder_forward.8} parent=0 // pred_region
    _
  $region17: #{encoder_forward.8} parent=0 // pred_fallthru
    _
  // Predicated region
  $region18: #{encoder_forward.8} parent=0 // pred_check
    _
  $region19: #{encoder_forward.8} parent=0 // pred_check_branch
    %335 = sbr.rel (0) target = $region21
  $region20: #{encoder_forward.8} parent=0 // pred_region
    _
  $region21: #{encoder_forward.8} parent=0 // pred_fallthru
    _

// kernel: encoder_forward.9
$region0: #{encoder_forward.9}
  #allocation0 [shape = 'u32[]', space=smem, size = 0x4, offset = 0x4, fixed_abs, tag = 'smem constant byte address 0x4 - core index']
  #allocation1 [shape = 'u32[144,128]{1,0:T(1,128)}', space=vmem, size = 0x12000, scoped, tag = 'internal scratch']
  %s0 = inlined_call_operand.vmem [shape: f32[64,32], index: 0, kind: input, shape index: {}]
  %s1 = inlined_call_operand.vmem [shape: f32[32,32], index: 1, kind: input, shape index: {}]
  %s2 = inlined_call_operand.vmem [shape: f32[1,32], index: 2, kind: input, shape index: {}]
  %s3 = inlined_call_operand.vmem [shape: f32[64,32], index: 3, kind: input, shape index: {}]
  %s4 = inlined_call_operand.vmem [shape: f32[64,32], index: 4, kind: output, shape index: {}]
  %s5 = sld [smem:[#allocation0]]
  $region26: #{encoder_forward.9} parent=0
    _
  %s7 = ssub.s32 1, %s5
  %s8 = scalar_select 0, %s7, %s5
  // Predicated region
  $region2: #{encoder_forward.9} parent=0 // pred_check
    _
  $region3: #{encoder_forward.9} parent=0 // pred_check_branch
    %10 = sbr.rel (0) target = $region5
  $region4: #{encoder_forward.9} parent=0 // pred_region
    _
  $region5: #{encoder_forward.9} parent=0 // pred_fallthru
    _
  // Predicated region
  $region6: #{encoder_forward.9} parent=0 // pred_check
    _
  $region7: #{encoder_forward.9} parent=0 // pred_check_branch
    %12 = sbr.rel (0) target = $region9
  $region8: #{encoder_forward.9} parent=0 // pred_region
    _
  $region9: #{encoder_forward.9} parent=0 // pred_fallthru
    _
  // Predicated region
  $region10: #{encoder_forward.9} parent=0 // pred_check
    _
  $region11: #{encoder_forward.9} parent=0 // pred_check_branch
    %14 = sbr.rel (0) target = $region13
  $region12: #{encoder_forward.9} parent=0 // pred_region
    _
  $region13: #{encoder_forward.9} parent=0 // pred_fallthru
    _
  // Predicated region
  $region14: #{encoder_forward.9} parent=0 // pred_check
    _
  $region15: #{encoder_forward.9} parent=0 // pred_check_branch
    %16 = sbr.rel (0) target = $region17
  $region16: #{encoder_forward.9} parent=0 // pred_region
    _
  $region17: #{encoder_forward.9} parent=0 // pred_fallthru
    _
  %v17 = vld [vmem:[%s0] sm:$0xff]
  %v18 = vld [vmem:[%s0 + $0x8] sm:$0xff]
  %v19 = vld [vmem:[%s0 + $0x10] sm:$0xff]
  %v20 = vld [vmem:[%s0 + $0x18] sm:$0xff]
  %v21 = vld [vmem:[%s0 + $0x20] sm:$0xff]
  %v22 = vld [vmem:[%s0 + $0x28] sm:$0xff]
  %v23 = vld [vmem:[%s0 + $0x30] sm:$0xff]
  %v24 = vld [vmem:[%s0 + $0x38] sm:$0xff]
  %v25 = vld [vmem:[%s1] sm:$0xff]
  %v26 = vld [vmem:[%s1 + $0x8] sm:$0xff]
  %v27 = vld [vmem:[%s1 + $0x10] sm:$0xff]
  %v28 = vld [vmem:[%s1 + $0x18] sm:$0xff]
  %v29 = vld [vmem:[%s2] sm:$0x1]
  %v31 = vlaneseq
  %v32 = vshrl.u32 %v31, 7
  %v33 = vsub.s32 0, %v32
  %v34 = vrot.slane %v29, %v33
  %vm36 = vcmask 261120
  %v38 = vsel %vm36, %v17, 0
  %v41 = vsel %vm36, %v18, 0
  %v44 = vsel %vm36, %v19, 0
  %v47 = vsel %vm36, %v20, 0
  %v50 = vsel %vm36, %v21, 0
  %v53 = vsel %vm36, %v22, 0
  %v56 = vsel %vm36, %v23, 0
  %v59 = vsel %vm36, %v24, 0
  %61 = vmatprep.subr.mxu0 0.0
  %62 = vmatpush1.msra.mxu0 %v25
  %63 = vmatprep.subr.mxu0 0.0
  %64 = vmatpush1.msra.mxu0 %v26
  %65 = vmatprep.subr.mxu0 0.0
  %66 = vmatpush1.msra.mxu0 %v27
  %67 = vmatprep.subr.mxu0 0.0
  %68 = vmatpush1.msra.mxu0 %v28
  %69 = vmatprep.subr.mxu0 0.0
  %70 = vmatpush1.msra.mxu0 0.0
  %71 = vmatprep.subr.mxu0 0.0
  %72 = vmatpush1.msra.mxu0 0.0
  %73 = vmatprep.subr.mxu0 0.0
  %74 = vmatpush1.msra.mxu0 0.0
  %75 = vmatprep.subr.mxu0 0.0
  %76 = vmatpush1.msra.mxu0 0.0
  %77 = vmatprep.subr.mxu0 0.0
  %78 = vmatpush1.msra.mxu0 0.0
  %79 = vmatprep.subr.mxu0 0.0
  %80 = vmatpush1.msra.mxu0 0.0
  %81 = vmatprep.subr.mxu0 0.0
  %82 = vmatpush1.msra.mxu0 0.0
  %83 = vmatprep.subr.mxu0 0.0
  %84 = vmatpush1.msra.mxu0 0.0
  %85 = vmatprep.subr.mxu0 0.0
  %86 = vmatpush1.msra.mxu0 0.0
  %87 = vmatprep.subr.mxu0 0.0
  %88 = vmatpush1.msra.mxu0 0.0
  %89 = vmatprep.subr.mxu0 0.0
  %90 = vmatpush1.msra.mxu0 0.0
  %91 = vmatprep.subr.mxu0 0.0
  %92 = vmatpush1.msra.mxu0 0.0
  %93 = vmatprep.subr.mxu0 0.0
  %94 = vmatpush1.msra.mxu0 0.0
  %95 = vmatprep.subr.mxu0 0.0
  %96 = vmatpush1.msra.mxu0 0.0
  %97 = vmatprep.subr.mxu0 0.0
  %98 = vmatpush1.msra.mxu0 0.0
  %99 = vmatprep.subr.mxu0 0.0
  %100 = vmatpush1.msra.mxu0 0.0
  %101 = vmatprep.subr.mxu0 0.0
  %102 = vmatpush1.msra.mxu0 0.0
  %103 = vmatprep.subr.mxu0 0.0
  %104 = vmatpush1.msra.mxu0 0.0
  %105 = vmatprep.subr.mxu0 0.0
  %106 = vmatpush1.msra.mxu0 0.0
  %107 = vmatprep.subr.mxu0 0.0
  %108 = vmatpush1.msra.mxu0 0.0
  %109 = vmatprep.subr.mxu0 0.0
  %110 = vmatpush1.msra.mxu0 0.0
  %111 = vmatprep.subr.mxu0 0.0
  %112 = vmatpush1.msra.mxu0 0.0
  %113 = vmatprep.subr.mxu0 0.0
  %114 = vmatpush1.msra.mxu0 0.0
  %115 = vmatprep.subr.mxu0 0.0
  %116 = vmatpush1.msra.mxu0 0.0
  %117 = vmatprep.subr.mxu0 0.0
  %118 = vmatpush1.msra.mxu0 0.0
  %119 = vmatprep.subr.mxu0 0.0
  %120 = vmatpush1.msra.mxu0 0.0
  %121 = vmatprep.subr.mxu0 0.0
  %122 = vmatpush1.msra.mxu0 0.0
  %123 = vmatprep.subr.mxu0 0.0
  %124 = vmatpush1.msra.mxu0 0.0
  %125 = vmatprep.mubr.f32.mxu0 0.0
  %126 = vmatmul.mubr.f32.gmra.mrb[0].mxu0 %v38
  %v127 = vpop.f32.mrb[0].mxu0
  %v128 = vadd.f32 %v34, %v127
  %v129 = vpop.f32.mrb[0].mxu0
  %130 = vmatprep.mubr.f32.mxu0 0.0
  %131 = vmatmul.mubr.f32.gmra.mrb[0].mxu0 %v41
  %v132 = vpop.f32.mrb[0].mxu0
  %v133 = vadd.f32 %v34, %v132
  %v134 = vpop.f32.mrb[0].mxu0
  %135 = vmatprep.mubr.f32.mxu0 0.0
  %136 = vmatmul.mubr.f32.gmra.mrb[0].mxu0 %v44
  %v137 = vpop.f32.mrb[0].mxu0
  %v138 = vadd.f32 %v34, %v137
  %v139 = vpop.f32.mrb[0].mxu0
  %140 = vmatprep.mubr.f32.mxu0 0.0
  %141 = vmatmul.mubr.f32.gmra.mrb[0].mxu0 %v47
  %v142 = vpop.f32.mrb[0].mxu0
  %v143 = vadd.f32 %v34, %v142
  %v144 = vpop.f32.mrb[0].mxu0
  %145 = vmatprep.mubr.f32.mxu0 0.0
  %146 = vmatmul.mubr.f32.gmra.mrb[0].mxu0 %v50
  %v147 = vpop.f32.mrb[0].mxu0
  %v148 = vadd.f32 %v34, %v147
  %v149 = vpop.f32.mrb[0].mxu0
  %150 = vmatprep.mubr.f32.mxu0 0.0
  %151 = vmatmul.mubr.f32.gmra.mrb[0].mxu0 %v53
  %v152 = vpop.f32.mrb[0].mxu0
  %v153 = vadd.f32 %v34, %v152
  %v154 = vpop.f32.mrb[0].mxu0
  %155 = vmatprep.mubr.f32.mxu0 0.0
  %156 = vmatmul.mubr.f32.gmra.mrb[0].mxu0 %v56
  %v157 = vpop.f32.mrb[0].mxu0
  %v158 = vadd.f32 %v34, %v157
  %v159 = vpop.f32.mrb[0].mxu0
  %160 = vmatprep.mubr.f32.mxu0 0.0
  %161 = vmatmul.mubr.f32.gmra.mrb[0].mxu0 %v59
  %v162 = vpop.f32.mrb[0].mxu0
  %v163 = vadd.f32 %v34, %v162
  %v164 = vpop.f32.mrb[0].mxu0
  %165 = vdwg.mxu0
  %v166 = vld [vmem:[%s3] sm:$0xff]
  %v167 = vld [vmem:[%s3 + $0x8] sm:$0xff]
  %v168 = vld [vmem:[%s3 + $0x10] sm:$0xff]
  %v169 = vld [vmem:[%s3 + $0x18] sm:$0xff]
  %v170 = vld [vmem:[%s3 + $0x20] sm:$0xff]
  %v171 = vld [vmem:[%s3 + $0x28] sm:$0xff]
  %v172 = vld [vmem:[%s3 + $0x30] sm:$0xff]
  %v173 = vld [vmem:[%s3 + $0x38] sm:$0xff]
  %v174 = vadd.f32 %v128, %v166
  %v175 = vadd.f32 %v133, %v167
  %v176 = vadd.f32 %v138, %v168
  %v177 = vadd.f32 %v143, %v169
  %v178 = vadd.f32 %v148, %v170
  %v179 = vadd.f32 %v153, %v171
  %v180 = vadd.f32 %v158, %v172
  %v181 = vadd.f32 %v163, %v173
  %182 = vst.msk [vmem:[%s4] sm:$0xff] %vm36, %v174
  %183 = vst.msk [vmem:[%s4 + $0x8] sm:$0xff] %vm36, %v175
  %184 = vst.msk [vmem:[%s4 + $0x10] sm:$0xff] %vm36, %v176
  %185 = vst.msk [vmem:[%s4 + $0x18] sm:$0xff] %vm36, %v177
  %186 = vst.msk [vmem:[%s4 + $0x20] sm:$0xff] %vm36, %v178
  %187 = vst.msk [vmem:[%s4 + $0x28] sm:$0xff] %vm36, %v179
  %188 = vst.msk [vmem:[%s4 + $0x30] sm:$0xff] %vm36, %v180
  %189 = vst.msk [vmem:[%s4 + $0x38] sm:$0xff] %vm36, %v181
  // Predicated region
  $region18: #{encoder_forward.9} parent=0 // pred_check
    _
  $region19: #{encoder_forward.9} parent=0 // pred_check_branch
    %191 = sbr.rel (0) target = $region21
  $region20: #{encoder_forward.9} parent=0 // pred_region
    _
  $region21: #{encoder_forward.9} parent=0 // pred_fallthru
    _
  // Predicated region
  $region22: #{encoder_forward.9} parent=0 // pred_check
    _
  $region23: #{encoder_forward.9} parent=0 // pred_check_branch
    %193 = sbr.rel (0) target = $region25
  $region24: #{encoder_forward.9} parent=0 // pred_region
    _
  $region25: #{encoder_forward.9} parent=0 // pred_fallthru
    _

// kernel: encoder_forward.11
$region0: #{encoder_forward.11}
  #allocation0 [shape = 'u32[]', space=smem, size = 0x4, offset = 0x4, fixed_abs, tag = 'smem constant byte address 0x4 - core index']
  #allocation1 [shape = 'u32[144,128]{1,0:T(1,128)}', space=vmem, size = 0x12000, scoped, tag = 'internal scratch']
  %s0 = inlined_call_operand.vmem [shape: f32[64,32], index: 0, kind: input, shape index: {}]
  %s1 = inlined_call_operand.vmem [shape: f32[32,32], index: 1, kind: input, shape index: {}]
  %s2 = inlined_call_operand.vmem [shape: f32[1,32], index: 2, kind: input, shape index: {}]
  %s3 = inlined_call_operand.vmem [shape: f32[64,32], index: 3, kind: input, shape index: {}]
  %s4 = inlined_call_operand.hbm [shape: f32[64,32], index: 4, kind: output, shape index: {}]
  %s5 = sld [smem:[#allocation0]]
  $region26: #{encoder_forward.11} parent=0
    _
  %s7 = ssub.s32 1, %s5
  %s8 = scalar_select 0, %s7, %s5
  $region1: #{encoder_forward.11} parent=0
    #allocation2 [shape = 'u8[32768]{0}', space=vmem, size = 0x8000, scoped, tag = 'output window, operand 0, single buffered']
    #allocation3 [shape = 's32[1]{0}', space=sflag, size = 0x4, scoped, tag = 'scoped memory for encoder_forward.11']
    %9 = vsyncpa [#allocation3], 0
    // Predicated region
    $region2: #{encoder_forward.11} parent=1 // pred_check
      _
    $region3: #{encoder_forward.11} parent=1 // pred_check_branch
      %11 = sbr.rel (0) target = $region5
    $region4: #{encoder_forward.11} parent=1 // pred_region
      _
    $region5: #{encoder_forward.11} parent=1 // pred_fallthru
      _
    // Predicated region
    $region6: #{encoder_forward.11} parent=1 // pred_check
      _
    $region7: #{encoder_forward.11} parent=1 // pred_check_branch
      %13 = sbr.rel (0) target = $region9
    $region8: #{encoder_forward.11} parent=1 // pred_region
      _
    $region9: #{encoder_forward.11} parent=1 // pred_fallthru
      _
    // Predicated region
    $region10: #{encoder_forward.11} parent=1 // pred_check
      _
    $region11: #{encoder_forward.11} parent=1 // pred_check_branch
      %15 = sbr.rel (0) target = $region13
    $region12: #{encoder_forward.11} parent=1 // pred_region
      _
    $region13: #{encoder_forward.11} parent=1 // pred_fallthru
      _
    // Predicated region
    $region14: #{encoder_forward.11} parent=1 // pred_check
      _
    $region15: #{encoder_forward.11} parent=1 // pred_check_branch
      %17 = sbr.rel (0) target = $region17
    $region16: #{encoder_forward.11} parent=1 // pred_region
      _
    $region17: #{encoder_forward.11} parent=1 // pred_fallthru
      _
    %v18 = vld [vmem:[%s0] sm:$0xff]
    %v19 = vld [vmem:[%s0 + $0x8] sm:$0xff]
    %v20 = vld [vmem:[%s0 + $0x10] sm:$0xff]
    %v21 = vld [vmem:[%s0 + $0x18] sm:$0xff]
    %v22 = vld [vmem:[%s0 + $0x20] sm:$0xff]
    %v23 = vld [vmem:[%s0 + $0x28] sm:$0xff]
    %v24 = vld [vmem:[%s0 + $0x30] sm:$0xff]
    %v25 = vld [vmem:[%s0 + $0x38] sm:$0xff]
    %v26 = vld [vmem:[%s1] sm:$0xff]
    %v27 = vld [vmem:[%s1 + $0x8] sm:$0xff]
    %v28 = vld [vmem:[%s1 + $0x10] sm:$0xff]
    %v29 = vld [vmem:[%s1 + $0x18] sm:$0xff]
    %v30 = vld [vmem:[%s2] sm:$0x1]
    %v32 = vlaneseq
    %v33 = vshrl.u32 %v32, 7
    %v34 = vsub.s32 0, %v33
    %v35 = vrot.slane %v30, %v34
    %vm37 = vcmask 261120
    %v39 = vsel %vm37, %v18, 0
    %v42 = vsel %vm37, %v19, 0
    %v45 = vsel %vm37, %v20, 0
    %v48 = vsel %vm37, %v21, 0
    %v51 = vsel %vm37, %v22, 0
    %v54 = vsel %vm37, %v23, 0
    %v57 = vsel %vm37, %v24, 0
    %v60 = vsel %vm37, %v25, 0
    %62 = vmatprep.subr.mxu0 0.0
    %63 = vmatpush1.msra.mxu0 %v26
    %64 = vmatprep.subr.mxu0 0.0
    %65 = vmatpush1.msra.mxu0 %v27
    %66 = vmatprep.subr.mxu0 0.0
    %67 = vmatpush1.msra.mxu0 %v28
    %68 = vmatprep.subr.mxu0 0.0
    %69 = vmatpush1.msra.mxu0 %v29
    %70 = vmatprep.subr.mxu0 0.0
    %71 = vmatpush1.msra.mxu0 0.0
    %72 = vmatprep.subr.mxu0 0.0
    %73 = vmatpush1.msra.mxu0 0.0
    %74 = vmatprep.subr.mxu0 0.0
    %75 = vmatpush1.msra.mxu0 0.0
    %76 = vmatprep.subr.mxu0 0.0
    %77 = vmatpush1.msra.mxu0 0.0
    %78 = vmatprep.subr.mxu0 0.0
    %79 = vmatpush1.msra.mxu0 0.0
    %80 = vmatprep.subr.mxu0 0.0
    %81 = vmatpush1.msra.mxu0 0.0
    %82 = vmatprep.subr.mxu0 0.0
    %83 = vmatpush1.msra.mxu0 0.0
    %84 = vmatprep.subr.mxu0 0.0
    %85 = vmatpush1.msra.mxu0 0.0
    %86 = vmatprep.subr.mxu0 0.0
    %87 = vmatpush1.msra.mxu0 0.0
    %88 = vmatprep.subr.mxu0 0.0
    %89 = vmatpush1.msra.mxu0 0.0
    %90 = vmatprep.subr.mxu0 0.0
    %91 = vmatpush1.msra.mxu0 0.0
    %92 = vmatprep.subr.mxu0 0.0
    %93 = vmatpush1.msra.mxu0 0.0
    %94 = vmatprep.subr.mxu0 0.0
    %95 = vmatpush1.msra.mxu0 0.0
    %96 = vmatprep.subr.mxu0 0.0
    %97 = vmatpush1.msra.mxu0 0.0
    %98 = vmatprep.subr.mxu0 0.0
    %99 = vmatpush1.msra.mxu0 0.0
    %100 = vmatprep.subr.mxu0 0.0
    %101 = vmatpush1.msra.mxu0 0.0
    %102 = vmatprep.subr.mxu0 0.0
    %103 = vmatpush1.msra.mxu0 0.0
    %104 = vmatprep.subr.mxu0 0.0
    %105 = vmatpush1.msra.mxu0 0.0
    %106 = vmatprep.subr.mxu0 0.0
    %107 = vmatpush1.msra.mxu0 0.0
    %108 = vmatprep.subr.mxu0 0.0
    %109 = vmatpush1.msra.mxu0 0.0
    %110 = vmatprep.subr.mxu0 0.0
    %111 = vmatpush1.msra.mxu0 0.0
    %112 = vmatprep.subr.mxu0 0.0
    %113 = vmatpush1.msra.mxu0 0.0
    %114 = vmatprep.subr.mxu0 0.0
    %115 = vmatpush1.msra.mxu0 0.0
    %116 = vmatprep.subr.mxu0 0.0
    %117 = vmatpush1.msra.mxu0 0.0
    %118 = vmatprep.subr.mxu0 0.0
    %119 = vmatpush1.msra.mxu0 0.0
    %120 = vmatprep.subr.mxu0 0.0
    %121 = vmatpush1.msra.mxu0 0.0
    %122 = vmatprep.subr.mxu0 0.0
    %123 = vmatpush1.msra.mxu0 0.0
    %124 = vmatprep.subr.mxu0 0.0
    %125 = vmatpush1.msra.mxu0 0.0
    %126 = vmatprep.mubr.f32.mxu0 0.0
    %127 = vmatmul.mubr.f32.gmra.mrb[0].mxu0 %v39
    %v128 = vpop.f32.mrb[0].mxu0
    %v129 = vadd.f32 %v35, %v128
    %v130 = vpop.f32.mrb[0].mxu0
    %131 = vmatprep.mubr.f32.mxu0 0.0
    %132 = vmatmul.mubr.f32.gmra.mrb[0].mxu0 %v42
    %v133 = vpop.f32.mrb[0].mxu0
    %v134 = vadd.f32 %v35, %v133
    %v135 = vpop.f32.mrb[0].mxu0
    %136 = vmatprep.mubr.f32.mxu0 0.0
    %137 = vmatmul.mubr.f32.gmra.mrb[0].mxu0 %v45
    %v138 = vpop.f32.mrb[0].mxu0
    %v139 = vadd.f32 %v35, %v138
    %v140 = vpop.f32.mrb[0].mxu0
    %141 = vmatprep.mubr.f32.mxu0 0.0
    %142 = vmatmul.mubr.f32.gmra.mrb[0].mxu0 %v48
    %v143 = vpop.f32.mrb[0].mxu0
    %v144 = vadd.f32 %v35, %v143
    %v145 = vpop.f32.mrb[0].mxu0
    %146 = vmatprep.mubr.f32.mxu0 0.0
    %147 = vmatmul.mubr.f32.gmra.mrb[0].mxu0 %v51
    %v148 = vpop.f32.mrb[0].mxu0
    %v149 = vadd.f32 %v35, %v148
    %v150 = vpop.f32.mrb[0].mxu0
    %151 = vmatprep.mubr.f32.mxu0 0.0
    %152 = vmatmul.mubr.f32.gmra.mrb[0].mxu0 %v54
    %v153 = vpop.f32.mrb[0].mxu0
    %v154 = vadd.f32 %v35, %v153
    %v155 = vpop.f32.mrb[0].mxu0
    %156 = vmatprep.mubr.f32.mxu0 0.0
    %157 = vmatmul.mubr.f32.gmra.mrb[0].mxu0 %v57
    %v158 = vpop.f32.mrb[0].mxu0
    %v159 = vadd.f32 %v35, %v158
    %v160 = vpop.f32.mrb[0].mxu0
    %161 = vmatprep.mubr.f32.mxu0 0.0
    %162 = vmatmul.mubr.f32.gmra.mrb[0].mxu0 %v60
    %v163 = vpop.f32.mrb[0].mxu0
    %v164 = vadd.f32 %v35, %v163
    %v165 = vpop.f32.mrb[0].mxu0
    %166 = vdwg.mxu0
    %v167 = vld [vmem:[%s3] sm:$0xff]
    %v168 = vld [vmem:[%s3 + $0x8] sm:$0xff]
    %v169 = vld [vmem:[%s3 + $0x10] sm:$0xff]
    %v170 = vld [vmem:[%s3 + $0x18] sm:$0xff]
    %v171 = vld [vmem:[%s3 + $0x20] sm:$0xff]
    %v172 = vld [vmem:[%s3 + $0x28] sm:$0xff]
    %v173 = vld [vmem:[%s3 + $0x30] sm:$0xff]
    %v174 = vld [vmem:[%s3 + $0x38] sm:$0xff]
    %v175 = vadd.f32 %v129, %v167
    %v176 = vadd.f32 %v134, %v168
    %v177 = vadd.f32 %v139, %v169
    %v178 = vadd.f32 %v144, %v170
    %v179 = vadd.f32 %v149, %v171
    %v180 = vadd.f32 %v154, %v172
    %v181 = vadd.f32 %v159, %v173
    %v182 = vadd.f32 %v164, %v174
    %183 = vst.msk [vmem:[#allocation2] sm:$0xff] %vm37, %v175
    %184 = vst.msk [vmem:[#allocation2 + $0x8] sm:$0xff] %vm37, %v176
    %185 = vst.msk [vmem:[#allocation2 + $0x10] sm:$0xff] %vm37, %v177
    %186 = vst.msk [vmem:[#allocation2 + $0x18] sm:$0xff] %vm37, %v178
    %187 = vst.msk [vmem:[#allocation2 + $0x20] sm:$0xff] %vm37, %v179
    %188 = vst.msk [vmem:[#allocation2 + $0x28] sm:$0xff] %vm37, %v180
    %189 = vst.msk [vmem:[#allocation2 + $0x30] sm:$0xff] %vm37, %v181
    %190 = vst.msk [vmem:[#allocation2 + $0x38] sm:$0xff] %vm37, %v182
    // Predicated region
    $region18: #{encoder_forward.11} parent=1 // pred_check
      _
    $region19: #{encoder_forward.11} parent=1 // pred_check_branch
      %192 = sbr.rel (0) target = $region21
    $region20: #{encoder_forward.11} parent=1 // pred_region
      %s194 = ssub.s32 1024, 1024
      %195 = vsyncadd [#allocation3], %s194
      %s196 = sshll.u32 [#allocation2], 4
      %s197 = int_to_ptr.vmem [resolvable:$true] %s196
      %202 = dma.vmem_to_hbm [thread:$0]  %s197, 1024, %s4, [#allocation3], 128, 128, 8
    $region21: #{encoder_forward.11} parent=1 // pred_fallthru
      _
    // Predicated region
    $region22: #{encoder_forward.11} parent=1 // pred_check
      _
    $region23: #{encoder_forward.11} parent=1 // pred_check_branch
      %204 = sbr.rel (0) target = $region25
    $region24: #{encoder_forward.11} parent=1 // pred_region
      %205 = dma.done [#allocation3], 1024
    $region25: #{encoder_forward.11} parent=1 // pred_fallthru
      _
    %206 = vsyncpa [#allocation3], 1

</llo_original>
